<compile_context>
chip_gen: v7x
topology: tpu7x:2x2x1
jax: 0.10.0
libtpu: 0.0.40
codegen_flags: <defaults>
</compile_context>

<pallas_src>
import jax
import jax.numpy as jnp
from jax.experimental import pallas as pl
from jax.experimental.pallas import tpu as pltpu


def _round_up(x, m):
    return (x + m - 1) // m * m


def _make_kernel(la, hw, tile_hw, batch_tile, needs_mask):
    inv_hw = 1.0 / float(hw)
    neg_inf = float("-inf")

    def kernel(x_ref, w_ref, o_ref, sum_ref, max_ref):
        # x_ref: (TB, C, T)  w_ref: (K_pad, C)  o_ref: (TB, K_pad, 1)
        # sum_ref/max_ref: (TB, K_pad, 1) f32 running accumulators.
        s = pl.program_id(1)
        n_s = pl.num_programs(1)

        @pl.when(s == 0)
        def _init():
            sum_ref[...] = jnp.zeros_like(sum_ref)
            max_ref[...] = jnp.full_like(max_ref, neg_inf)

        w = w_ref[...]  # (K_pad, C), resident in VMEM across all spatial tiles

        if needs_mask:
            # Mask columns beyond the true HW extent (ragged last tile / OOB block).
            cols = jax.lax.broadcasted_iota(jnp.int32, (1, tile_hw), 1) + s * tile_hw
            valid = cols < hw  # (1, T), broadcasts over K rows

        for tb in range(batch_tile):  # small static unroll over batch tile
            # 1x1 conv == matmul on the MXU: (K_pad, C) @ (C, T) -> (K_pad, T)
            y = jnp.dot(w, x_ref[tb], preferred_element_type=jnp.float32)
            if needs_mask:
                y_sum = jnp.where(valid, y, 0.0)
                y_max = jnp.where(valid, y, neg_inf)
            else:
                y_sum = y
                y_max = y
            sum_ref[tb] += jnp.sum(y_sum, axis=1, keepdims=True)          # (K_pad, 1)
            max_ref[tb] = jnp.maximum(max_ref[tb],
                                      jnp.max(y_max, axis=1, keepdims=True))

        @pl.when(s == n_s - 1)
        def _finalize():
            score = sum_ref[...] * inv_hw + la * max_ref[...]
            o_ref[...] = score.astype(o_ref.dtype)

    return kernel


def _choose_tiling(b, c, hw, itemsize, batch_tile, tile_hw):
    hw128 = _round_up(hw, 128)
    if batch_tile is None:
        # Batch several small images per grid step to amortize per-step overhead.
        per_batch_bytes = c * hw128 * itemsize
        batch_tile = max(1, min(b, 8, (2 * 1024 * 1024) // max(per_batch_bytes, 1)))
    batch_tile = max(1, min(batch_tile, b))
    if tile_hw is None:
        # Keep the (double-buffered) x block around <= ~8 MiB total on every gen.
        budget = 4 * 1024 * 1024
        tile_hw = (budget // max(batch_tile * c * itemsize, 1)) // 128 * 128
        tile_hw = max(128, min(tile_hw, hw128))
    assert tile_hw % 128 == 0, "tile_hw must be a multiple of 128"
    return batch_tile, tile_hw


def residual_attention(x_nchw, conv_w, la=0.2, *, batch_tile=None, tile_hw=None,
                       vmem_limit_bytes=48 * 1024 * 1024):
    """x_nchw: (B, C, H, W); conv_w: (K, C, 1, 1)  ->  (B, K) float32 scores."""
    b, c, h, w = x_nchw.shape
    k = conv_w.shape[0]
    hw = h * w

    # Free reshape: keep the native (B, C, HW) layout (no transpose pass over x).
    x_bcs = x_nchw.reshape(b, c, hw)

    # Tiny weight: reshape to (K, C), pad K to a multiple of 128 (lane/MXU friendly).
    w_kc = conv_w.reshape(k, c).astype(x_nchw.dtype)
    k_pad = _round_up(k, 128)
    if k_pad != k:
        w_kc = jnp.pad(w_kc, ((0, k_pad - k), (0, 0)))

    itemsize = jnp.dtype(x_nchw.dtype).itemsize
    batch_tile, tile_hw = _choose_tiling(b, c, hw, itemsize, batch_tile, tile_hw)

    grid = (pl.cdiv(b, batch_tile), pl.cdiv(hw, tile_hw))
    needs_mask = (hw % tile_hw) != 0

    # TODO(synk): `la` is baked in via closure (recompiles if it changes); pass it as
    # an SMEM scalar if it must vary at runtime.
    out = pl.pallas_call(
        _make_kernel(float(la), hw, tile_hw, batch_tile, needs_mask),
        out_shape=jax.ShapeDtypeStruct((b, k_pad, 1), jnp.float32),
        grid_spec=pltpu.PrefetchScalarGridSpec(
            num_scalar_prefetch=0,
            grid=grid,
            in_specs=[
                # Stream x spatial tiles; batch axis is the leading ("parallel") grid dim.
                pl.BlockSpec((batch_tile, c, tile_hw), lambda bi, s: (bi, 0, s)),
                # Weight: constant index_map -> stays resident in VMEM.
                pl.BlockSpec((k_pad, c), lambda bi, s: (0, 0)),
            ],
            out_specs=pl.BlockSpec((batch_tile, k_pad, 1), lambda bi, s: (bi, 0, 0)),
            scratch_shapes=[
                pltpu.VMEM((batch_tile, k_pad, 1), jnp.float32),  # running sum
                pltpu.VMEM((batch_tile, k_pad, 1), jnp.float32),  # running max
            ],
        ),
        compiler_params=pltpu.CompilerParams(
            dimension_semantics=("parallel", "arbitrary"),
            vmem_limit_bytes=int(vmem_limit_bytes),
        ),
    )(x_bcs, w_kc)

    return out[:, :k, 0]


def residual_attention_ref(x_nchw, conv_w, la=0.2):
    """Pure-JAX reference mirroring the PyTorch forward."""
    b, c, h, w = x_nchw.shape
    k = conv_w.shape[0]
    y_raw = jnp.einsum('kc,bcs->bks', conv_w.reshape(k, c),
                       x_nchw.reshape(b, c, h * w))
    y_avg = jnp.mean(y_raw, axis=2)
    y_max = jnp.max(y_raw, axis=2)
    return y_avg + la * y_max


if __name__ == "__main__":
    # Small shapes consistent with the module (channel -> num_class 1x1 conv).
    # NUM_CLASS=100 exercises the K->128 padding; tile_hw=256 with HW=576 exercises
    # multi-tile spatial streaming plus the ragged last-tile mask path.
    B, C, H, W = 2, 64, 24, 24
    NUM_CLASS = 100
    LA = 0.2

    key = jax.random.PRNGKey(0)
    kx, kw = jax.random.split(key)
    x = jax.random.normal(kx, (B, C, H, W), dtype=jnp.float32)
    conv_w = (jax.random.normal(kw, (NUM_CLASS, C, 1, 1), dtype=jnp.float32)
              * (2.0 / C) ** 0.5)

    out = residual_attention(x, conv_w, la=LA, tile_hw=256)
    out = jax.block_until_ready(out)

    ref = residual_attention_ref(x, conv_w, la=LA)
    assert out.shape == (B, NUM_CLASS)
    assert jnp.allclose(out, ref, atol=1e-3, rtol=1e-3), "mismatch vs reference"

    print("KERNEL_OK")
</pallas_src>

<mosaic_0001>
module attributes {stable_mosaic.version = 11 : i64} {
  func.func @kernel(%arg0: i32, %arg1: i32, %arg2: memref<2x64x256xf32, #tpu.memory_space<vmem>>, %arg3: memref<128x64xf32, #tpu.memory_space<vmem>>, %arg4: memref<2x128x1xf32, #tpu.memory_space<vmem>>, %arg5: memref<2x128x1xf32, #tpu.memory_space<vmem>>, %arg6: memref<2x128x1xf32, #tpu.memory_space<vmem>>) attributes {dimension_semantics = [#tpu.dimension_semantics<parallel>, #tpu.dimension_semantics<arbitrary>], iteration_bounds = array<i64: 1, 3>, scalar_prefetch = 0 : i64, scratch_operands = 2 : i64, tpu.core_type = #tpu.core_type<tc>, window_params = [{transform_indices = @transform_0, window_bounds = array<i64: 2, 64, 256>}, {pipeline_mode = #tpu.pipeline_mode<synchronous>, transform_indices = @transform_1, window_bounds = array<i64: 128, 64>}, {transform_indices = @transform_2, window_bounds = array<i64: 2, 128, 1>}]} {
    %c0_i32 = arith.constant 0 : i32
    %0 = arith.cmpi eq, %arg1, %c0_i32 : i32
    %1 = arith.extui %0 : i1 to i32
    %c0_i32_0 = arith.constant 0 : i32
    %2 = arith.cmpi ne, %1, %c0_i32_0 : i32
    scf.if %2 {
      %cst_41 = arith.constant 0.000000e+00 : f32
      %67 = vector.broadcast %cst_41 : f32 to vector<2x128x1xf32>
      %c0_42 = arith.constant 0 : index
      %c0_43 = arith.constant 0 : index
      %c0_44 = arith.constant 0 : index
      %68 = vector.load %arg5[%c0_42, %c0_43, %c0_44] : memref<2x128x1xf32, #tpu.memory_space<vmem>>, vector<2x128x1xf32>
      tpu.vector_store %arg5[%c0_42, %c0_43, %c0_44], %67 {strides = array<i32>} : memref<2x128x1xf32, #tpu.memory_space<vmem>>, vector<2x128x1xf32>,
      %cst_45 = arith.constant 0xFF800000 : f32
      %69 = vector.broadcast %cst_45 : f32 to vector<2x128x1xf32>
      %c0_46 = arith.constant 0 : index
      %c0_47 = arith.constant 0 : index
      %c0_48 = arith.constant 0 : index
      %70 = vector.load %arg6[%c0_46, %c0_47, %c0_48] : memref<2x128x1xf32, #tpu.memory_space<vmem>>, vector<2x128x1xf32>
      tpu.vector_store %arg6[%c0_46, %c0_47, %c0_48], %69 {strides = array<i32>} : memref<2x128x1xf32, #tpu.memory_space<vmem>>, vector<2x128x1xf32>,
    } else {
    }
    %c0 = arith.constant 0 : index
    %c0_1 = arith.constant 0 : index
    %3 = vector.load %arg3[%c0, %c0_1] : memref<128x64xf32, #tpu.memory_space<vmem>>, vector<128x64xf32>
    %4 = tpu.iota {dimensions = array<i32: 1>} : vector<1x256xi32>
    %c256_i32 = arith.constant 256 : i32
    %5 = arith.muli %arg1, %c256_i32 : i32
    %6 = vector.broadcast %5 : i32 to vector<1x256xi32>
    %7 = arith.addi %4, %6 : vector<1x256xi32>
    %c576_i32 = arith.constant 576 : i32
    %8 = vector.broadcast %c576_i32 : i32 to vector<1x256xi32>
    %9 = arith.cmpi slt, %7, %8 : vector<1x256xi32>
    %c0_2 = arith.constant 0 : index
    %c0_3 = arith.constant 0 : index
    %c0_4 = arith.constant 0 : index
    %10 = vector.load %arg2[%c0_2, %c0_3, %c0_4] : memref<2x64x256xf32, #tpu.memory_space<vmem>>, vector<1x64x256xf32>
    %11 = vector.shape_cast %10 : vector<1x64x256xf32> to vector<64x256xf32>
    %cst = arith.constant dense<0.000000e+00> : vector<128x256xf32>
    %12 = tpu.matmul %3, %11, %cst {dimension_numbers = #tpu.dot_dimension_numbers<[1], [0], [0], [1], [0, 0, 1, 1], [], []>} : vector<128x64xf32>, vector<64x256xf32>, vector<128x256xf32> -> vector<128x256xf32>
    %cst_5 = arith.constant 0.000000e+00 : f32
    %13 = vector.shape_cast %9 : vector<1x256xi1> to vector<1x256xi1>
    %14 = vector.broadcast %13 : vector<1x256xi1> to vector<128x256xi1>
    %15 = vector.broadcast %cst_5 : f32 to vector<128x256xf32>
    %16 = arith.select %14, %12, %15 : vector<128x256xi1>, vector<128x256xf32>
    %cst_6 = arith.constant 0xFF800000 : f32
    %17 = vector.shape_cast %9 : vector<1x256xi1> to vector<1x256xi1>
    %18 = vector.broadcast %17 : vector<1x256xi1> to vector<128x256xi1>
    %19 = vector.broadcast %cst_6 : f32 to vector<128x256xf32>
    %20 = arith.select %18, %12, %19 : vector<128x256xi1>, vector<128x256xf32>
    %c0_7 = arith.constant 0 : index
    %c0_8 = arith.constant 0 : index
    %c0_9 = arith.constant 0 : index
    %21 = vector.load %arg5[%c0_7, %c0_8, %c0_9] : memref<2x128x1xf32, #tpu.memory_space<vmem>>, vector<1x128x1xf32>
    %22 = vector.shape_cast %21 : vector<1x128x1xf32> to vector<128x1xf32>
    %cst_10 = arith.constant dense<0.000000e+00> : vector<128xf32>
    %23 = vector.multi_reduction <add>, %16, %cst_10 [1] : vector<128x256xf32> to vector<128xf32>
    %24 = vector.shape_cast %23 : vector<128xf32> to vector<128x1xf32>
    %25 = arith.addf %22, %24 : vector<128x1xf32>
    %c0_11 = arith.constant 0 : index
    %c0_12 = arith.constant 0 : index
    %c0_13 = arith.constant 0 : index
    %26 = vector.load %arg5[%c0_11, %c0_12, %c0_13] : memref<2x128x1xf32, #tpu.memory_space<vmem>>, vector<1x128x1xf32>
    %27 = vector.shape_cast %26 : vector<1x128x1xf32> to vector<128x1xf32>
    %28 = vector.shape_cast %25 : vector<128x1xf32> to vector<1x128x1xf32>
    tpu.vector_store %arg5[%c0_11, %c0_12, %c0_13], %28 {strides = array<i32>} : memref<2x128x1xf32, #tpu.memory_space<vmem>>, vector<1x128x1xf32>,
    %c0_14 = arith.constant 0 : index
    %c0_15 = arith.constant 0 : index
    %c0_16 = arith.constant 0 : index
    %29 = vector.load %arg6[%c0_14, %c0_15, %c0_16] : memref<2x128x1xf32, #tpu.memory_space<vmem>>, vector<1x128x1xf32>
    %30 = vector.shape_cast %29 : vector<1x128x1xf32> to vector<128x1xf32>
    %cst_17 = arith.constant dense<0xFF800000> : vector<128xf32>
    %31 = vector.multi_reduction <maximumf>, %20, %cst_17 [1] : vector<128x256xf32> to vector<128xf32>
    %32 = vector.shape_cast %31 : vector<128xf32> to vector<128x1xf32>
    %33 = arith.maximumf %30, %32 : vector<128x1xf32>
    %c0_18 = arith.constant 0 : index
    %c0_19 = arith.constant 0 : index
    %c0_20 = arith.constant 0 : index
    %34 = vector.load %arg6[%c0_18, %c0_19, %c0_20] : memref<2x128x1xf32, #tpu.memory_space<vmem>>, vector<1x128x1xf32>
    %35 = vector.shape_cast %34 : vector<1x128x1xf32> to vector<128x1xf32>
    %36 = vector.shape_cast %33 : vector<128x1xf32> to vector<1x128x1xf32>
    tpu.vector_store %arg6[%c0_18, %c0_19, %c0_20], %36 {strides = array<i32>} : memref<2x128x1xf32, #tpu.memory_space<vmem>>, vector<1x128x1xf32>,
    %c1 = arith.constant 1 : index
    %c0_21 = arith.constant 0 : index
    %c0_22 = arith.constant 0 : index
    %37 = vector.load %arg2[%c1, %c0_21, %c0_22] : memref<2x64x256xf32, #tpu.memory_space<vmem>>, vector<1x64x256xf32>
    %38 = vector.shape_cast %37 : vector<1x64x256xf32> to vector<64x256xf32>
    %cst_23 = arith.constant dense<0.000000e+00> : vector<128x256xf32>
    %39 = tpu.matmul %3, %38, %cst_23 {dimension_numbers = #tpu.dot_dimension_numbers<[1], [0], [0], [1], [0, 0, 1, 1], [], []>} : vector<128x64xf32>, vector<64x256xf32>, vector<128x256xf32> -> vector<128x256xf32>
    %cst_24 = arith.constant 0.000000e+00 : f32
    %40 = vector.shape_cast %9 : vector<1x256xi1> to vector<1x256xi1>
    %41 = vector.broadcast %40 : vector<1x256xi1> to vector<128x256xi1>
    %42 = vector.broadcast %cst_24 : f32 to vector<128x256xf32>
    %43 = arith.select %41, %39, %42 : vector<128x256xi1>, vector<128x256xf32>
    %cst_25 = arith.constant 0xFF800000 : f32
    %44 = vector.shape_cast %9 : vector<1x256xi1> to vector<1x256xi1>
    %45 = vector.broadcast %44 : vector<1x256xi1> to vector<128x256xi1>
    %46 = vector.broadcast %cst_25 : f32 to vector<128x256xf32>
    %47 = arith.select %45, %39, %46 : vector<128x256xi1>, vector<128x256xf32>
    %c1_26 = arith.constant 1 : index
    %c0_27 = arith.constant 0 : index
    %c0_28 = arith.constant 0 : index
    %48 = vector.load %arg5[%c1_26, %c0_27, %c0_28] : memref<2x128x1xf32, #tpu.memory_space<vmem>>, vector<1x128x1xf32>
    %49 = vector.shape_cast %48 : vector<1x128x1xf32> to vector<128x1xf32>
    %cst_29 = arith.constant dense<0.000000e+00> : vector<128xf32>
    %50 = vector.multi_reduction <add>, %43, %cst_29 [1] : vector<128x256xf32> to vector<128xf32>
    %51 = vector.shape_cast %50 : vector<128xf32> to vector<128x1xf32>
    %52 = arith.addf %49, %51 : vector<128x1xf32>
    %c1_30 = arith.constant 1 : index
    %c0_31 = arith.constant 0 : index
    %c0_32 = arith.constant 0 : index
    %53 = vector.load %arg5[%c1_30, %c0_31, %c0_32] : memref<2x128x1xf32, #tpu.memory_space<vmem>>, vector<1x128x1xf32>
    %54 = vector.shape_cast %53 : vector<1x128x1xf32> to vector<128x1xf32>
    %55 = vector.shape_cast %52 : vector<128x1xf32> to vector<1x128x1xf32>
    tpu.vector_store %arg5[%c1_30, %c0_31, %c0_32], %55 {strides = array<i32>} : memref<2x128x1xf32, #tpu.memory_space<vmem>>, vector<1x128x1xf32>,
    %c1_33 = arith.constant 1 : index
    %c0_34 = arith.constant 0 : index
    %c0_35 = arith.constant 0 : index
    %56 = vector.load %arg6[%c1_33, %c0_34, %c0_35] : memref<2x128x1xf32, #tpu.memory_space<vmem>>, vector<1x128x1xf32>
    %57 = vector.shape_cast %56 : vector<1x128x1xf32> to vector<128x1xf32>
    %cst_36 = arith.constant dense<0xFF800000> : vector<128xf32>
    %58 = vector.multi_reduction <maximumf>, %47, %cst_36 [1] : vector<128x256xf32> to vector<128xf32>
    %59 = vector.shape_cast %58 : vector<128xf32> to vector<128x1xf32>
    %60 = arith.maximumf %57, %59 : vector<128x1xf32>
    %c1_37 = arith.constant 1 : index
    %c0_38 = arith.constant 0 : index
    %c0_39 = arith.constant 0 : index
    %61 = vector.load %arg6[%c1_37, %c0_38, %c0_39] : memref<2x128x1xf32, #tpu.memory_space<vmem>>, vector<1x128x1xf32>
    %62 = vector.shape_cast %61 : vector<1x128x1xf32> to vector<128x1xf32>
    %63 = vector.shape_cast %60 : vector<128x1xf32> to vector<1x128x1xf32>
    tpu.vector_store %arg6[%c1_37, %c0_38, %c0_39], %63 {strides = array<i32>} : memref<2x128x1xf32, #tpu.memory_space<vmem>>, vector<1x128x1xf32>,
    %c2_i32 = arith.constant 2 : i32
    %64 = arith.cmpi eq, %arg1, %c2_i32 : i32
    %65 = arith.extui %64 : i1 to i32
    %c0_i32_40 = arith.constant 0 : i32
    %66 = arith.cmpi ne, %65, %c0_i32_40 : i32
    scf.if %66 {
      %c0_41 = arith.constant 0 : index
      %c0_42 = arith.constant 0 : index
      %c0_43 = arith.constant 0 : index
      %67 = vector.load %arg5[%c0_41, %c0_42, %c0_43] : memref<2x128x1xf32, #tpu.memory_space<vmem>>, vector<2x128x1xf32>
      %cst_44 = arith.constant 0.00173611112 : f32
      %68 = vector.broadcast %cst_44 : f32 to vector<2x128x1xf32>
      %69 = arith.mulf %67, %68 : vector<2x128x1xf32>
      %c0_45 = arith.constant 0 : index
      %c0_46 = arith.constant 0 : index
      %c0_47 = arith.constant 0 : index
      %70 = vector.load %arg6[%c0_45, %c0_46, %c0_47] : memref<2x128x1xf32, #tpu.memory_space<vmem>>, vector<2x128x1xf32>
      %cst_48 = arith.constant 2.000000e-01 : f32
      %71 = vector.broadcast %cst_48 : f32 to vector<2x128x1xf32>
      %72 = arith.mulf %71, %70 : vector<2x128x1xf32>
      %73 = arith.addf %69, %72 : vector<2x128x1xf32>
      %c0_49 = arith.constant 0 : index
      %c0_50 = arith.constant 0 : index
      %c0_51 = arith.constant 0 : index
      %74 = vector.load %arg4[%c0_49, %c0_50, %c0_51] : memref<2x128x1xf32, #tpu.memory_space<vmem>>, vector<2x128x1xf32>
      tpu.vector_store %arg4[%c0_49, %c0_50, %c0_51], %73 {strides = array<i32>} : memref<2x128x1xf32, #tpu.memory_space<vmem>>, vector<2x128x1xf32>,
    } else {
    }
    return
  }
  func.func @transform_0(%arg0: i32, %arg1: i32) -> (i32, i32, i32) {
    %c0_i32 = arith.constant 0 : i32
    %c0_i32_0 = arith.constant 0 : i32
    return %arg0, %c0_i32, %arg1 : i32, i32, i32
  }
  func.func @transform_1(%arg0: i32, %arg1: i32) -> (i32, i32) {
    %c0_i32 = arith.constant 0 : i32
    %c0_i32_0 = arith.constant 0 : i32
    %c0_i32_1 = arith.constant 0 : i32
    return %c0_i32, %c0_i32_0 : i32, i32
  }
  func.func @transform_2(%arg0: i32, %arg1: i32) -> (i32, i32, i32) {
    %c0_i32 = arith.constant 0 : i32
    %c0_i32_0 = arith.constant 0 : i32
    %c0_i32_1 = arith.constant 0 : i32
    return %arg0, %c0_i32, %c0_i32_0 : i32, i32, i32
  }
}

</mosaic_0001>

<llo_original>
// kernel: tpu_custom_call.1
$region0: #{tpu_custom_call.1}
  #allocation0 [shape = 'u32[]', space=smem, size = 0x4, offset = 0x4, fixed_abs, tag = 'smem constant byte address 0x4 - core index']
  #allocation1 [shape = 'u32[144,128]{1,0:T(1,128)}', space=vmem, size = 0x12000, scoped, tag = 'internal scratch']
  #allocation2 [shape = 'f32[2,128,1]{2,1,0:T(8,128)}', space=vmem, size = 0x20000, scoped, tag = 'scratch operand']
  #allocation3 [shape = 'f32[2,128,1]{2,1,0:T(8,128)}', space=vmem, size = 0x20000, scoped, tag = 'scratch operand']
  %s0 = inlined_call_operand.hbm [shape: f32[2,64,576], index: 0, kind: input, shape index: {}]
  %s1 = inlined_call_operand.vmem [shape: f32[128,64], index: 1, kind: input, shape index: {}]
  %s2 = inlined_call_operand.vmem [shape: f32[2,128,1], index: 2, kind: output, shape index: {}]
  %s3 = sld [smem:[#allocation0]]
  $region53: #{tpu_custom_call.1} parent=0
    _
  %s5 = ssub.s32 1, %s3
  %s6 = scalar_select 0, %s5, %s3
  $region1: #{tpu_custom_call.1} parent=0
    #allocation4 [shape = 'u8[262144]{0}', space=vmem, size = 0x40000, scoped, tag = 'input window, operand 0']
    #allocation5 [shape = 's32[2]{0}', space=sflag, size = 0x8, scoped, tag = 'scoped memory for tpu_custom_call.1']
    %7 = vsyncpa [#allocation5], 0
    %s8 = scalar_lea.sflag [#allocation5], 1
    %9 = vsyncpa %s8, 0
    loop: start=0, step=1, limit=5
    $region2: #{tpu_custom_call.1} parent=1 // loop_pre_header
      _
    $region3: #{tpu_custom_call.1} parent=1 // loop_header
      %s11 = sphi 0, %s15
      %p12 = scmp.ge.s32.totalorder %s11, 5
      %s18 = sphi 0, %s30
      %s19 = sphi 0, %s26
      %s20 = sphi 0, %s18
      %s21 = sphi 0, %s19
      %s22 = sphi 0, %s20
      %s23 = sphi 0, %s21
      %s35 = sphi 0, %s37
      %s38 = sphi 0, %s35
      %s39 = sphi 0, %s38
      %s55 = sphi 0, %s39
      %s59 = sphi 0, %s59
      %s61 = sphi 0, %s59
      %s62 = sphi 0, %s61
      %s76 = sphi 0, %s62
      %s82 = sphi 0, %s84
      %s85 = sphi 0, %s82
      %s86 = sphi 0, %s85
      %s102 = sphi 0, %s86
    $region4: #{tpu_custom_call.1} parent=1 // loop_header_branch
      %14 = sbr.rel (%p12) target = $region8
    $region5: #{tpu_custom_call.1} parent=1 // loop_body
      %s16 = ssub.s32 %s11, 1
      %s17 = ssub.s32 %s11, 2
      %s24 = sadd.s32 1, %s19
      %p25 = scmp.ge.s32.totalorder %s24, 3
      %s26 = scalar_select %p25, 0, %s24
      %s27 = sadd.s32 1, %s18
      %s28 = scalar_select %p25, %s27, %s18
      %p29 = scmp.ge.s32.totalorder %s28, 1
      %s30 = scalar_select %p29, 0, %s28
      %s31 = ssub.s32 %s18, %s30
      %s32 = ssub.s32 %s19, %s26
      %s33 = sor.u32 %s31, %s32
      %p34 = scmp.eq.s32.totalorder %s33, 0
      %s36 = sadd.s32 %s35, 1
      %s37 = scalar_select %p34, %s35, %s36
      %p40 = pneg %p34
      %p41 = scmp.eq.s32.totalorder %s11, 2
      %p42 = por %p40, %p41
      %p43 = scmp.ne.s32.totalorder %s35, %s38
      %p44 = scmp.eq.s32.totalorder %s11, 0
      %p45 = por %p43, %p44
      %p46 = scmp.ne.s32.totalorder %s35, %s38
      %p47 = scmp.eq.s32.totalorder %s16, 2
      %p48 = por %p46, %p47
      %p49 = scmp.ne.s32.totalorder %s38, %s39
      %p50 = scmp.eq.s32.totalorder %s16, 0
      %p51 = por %p49, %p50
      %p52 = scmp.ne.s32.totalorder %s38, %s39
      %p53 = scmp.eq.s32.totalorder %s17, 2
      %p54 = por %p52, %p53
      %p56 = scmp.ne.s32.totalorder %s39, %s55
      %p57 = scmp.eq.s32.totalorder %s17, 0
      %p58 = por %p56, %p57
      %s60 = sadd.s32 %s59, 1
      %p63 = scmp.eq.s32.totalorder %s11, 2
      %p64 = scmp.ne.s32.totalorder %s59, %s61
      %p65 = scmp.eq.s32.totalorder %s11, 0
      %p66 = por %p64, %p65
      %p67 = scmp.ne.s32.totalorder %s59, %s61
      %p68 = scmp.eq.s32.totalorder %s16, 2
      %p69 = por %p67, %p68
      %p70 = scmp.ne.s32.totalorder %s61, %s62
      %p71 = scmp.eq.s32.totalorder %s16, 0
      %p72 = por %p70, %p71
      %p73 = scmp.ne.s32.totalorder %s61, %s62
      %p74 = scmp.eq.s32.totalorder %s17, 2
      %p75 = por %p73, %p74
      %p77 = scmp.ne.s32.totalorder %s62, %s76
      %p78 = scmp.eq.s32.totalorder %s17, 0
      %p79 = por %p77, %p78
      %s80 = ssub.s32 %s18, %s30
      %p81 = scmp.eq.s32.totalorder %s80, 0
      %s83 = sadd.s32 %s82, 1
      %s84 = scalar_select %p81, %s82, %s83
      %p87 = pneg %p81
      %p88 = scmp.eq.s32.totalorder %s11, 2
      %p89 = por %p87, %p88
      %p90 = scmp.ne.s32.totalorder %s82, %s85
      %p91 = scmp.eq.s32.totalorder %s11, 0
      %p92 = por %p90, %p91
      %p93 = scmp.ne.s32.totalorder %s82, %s85
      %p94 = scmp.eq.s32.totalorder %s16, 2
      %p95 = por %p93, %p94
      %p96 = scmp.ne.s32.totalorder %s85, %s86
      %p97 = scmp.eq.s32.totalorder %s16, 0
      %p98 = por %p96, %p97
      %p99 = scmp.ne.s32.totalorder %s85, %s86
      %p100 = scmp.eq.s32.totalorder %s17, 2
      %p101 = por %p99, %p100
      %p103 = scmp.ne.s32.totalorder %s86, %s102
      %p104 = scmp.eq.s32.totalorder %s17, 0
      %p105 = por %p103, %p104
      %p106 = scmp.le.s32.totalorder 1, %s11
      %p107 = scmp.lt.s32.totalorder %s11, 4
      %p108 = pnand %p106, %p107
      %p109 = pneg %p108
      // Predicated region
      $region9: #{tpu_custom_call.1} parent=5 // pred_check
        _
      $region10: #{tpu_custom_call.1} parent=5 // pred_check_branch
        %111 = sbr.rel (%p108) target = $region12
      $region11: #{tpu_custom_call.1} parent=5 // pred_region
        %s112 = ssub.s32 %s11, 1
        // Predicated region
        $region13: #{tpu_custom_call.1} parent=11 // pred_check
          %p113 = pneg %p72
        $region14: #{tpu_custom_call.1} parent=11 // pred_check_branch
          %115 = sbr.rel (%p113) target = $region16
        $region15: #{tpu_custom_call.1} parent=11 // pred_region
          _
        $region16: #{tpu_custom_call.1} parent=11 // pred_fallthru
          _
      $region12: #{tpu_custom_call.1} parent=5 // pred_fallthru
        _
      %p116 = scmp.lt.s32.totalorder %s11, 3
      // Predicated region
      $region17: #{tpu_custom_call.1} parent=5 // pred_check
        %p117 = pneg %p116
      $region18: #{tpu_custom_call.1} parent=5 // pred_check_branch
        %119 = sbr.rel (%p117) target = $region20
      $region19: #{tpu_custom_call.1} parent=5 // pred_region
        // Predicated region
        $region21: #{tpu_custom_call.1} parent=19 // pred_check
          %p120 = pneg %p45
        $region22: #{tpu_custom_call.1} parent=19 // pred_check_branch
          %122 = sbr.rel (%p120) target = $region24
        $region23: #{tpu_custom_call.1} parent=19 // pred_region
          %s123 = sand.u32 %s35, 1
          %s124 = scalar_lea.sflag [#allocation5], %s123
          %s125 = sand.u32 %s35, 1
          %s126 = smul.addr %s125, 256
          %s127 = scalar_lea.vmem [#allocation4], %s126
          %s128 = smul.u32 2, %s18
          %s129 = smul.u32 2, %s19
          %s130 = ssub.s32 5, %s129
          %p131 = scmp.lt.s32.totalorder %s130, 2
          %s132 = scalar_select %p131, %s130, 2
          %s133 = smul.u32 2048, %s132
          %s135 = ssub.s32 4096, %s133
          %136 = vsyncadd %s124, %s135
          %p137 = scmp.ne.s32.totalorder 0, %s133
          %s138 = smul.addr %s128, 40
          %s139 = sadd.s32 %s129, %s138
          %s140 = smul.addr %s139, 128
          %s141 = scalar_lea.hbm %s0, %s140
          %s142 = smul.u32 %s132, 8
          %s143 = smul.u32 %s142, 16
          %s144 = sshll.u32 %s127, 4
          %s145 = int_to_ptr.vmem [resolvable:$true] %s144
          %s146 = sshll.u32 %s143, 4
          %150 = dma.hbm_to_vmem [thread:$0]  (%p137), %s141, %s146, %s145, %s124, 640, 256, %s142
        $region24: #{tpu_custom_call.1} parent=19 // pred_fallthru
          _
      $region20: #{tpu_custom_call.1} parent=5 // pred_fallthru
        _
      %p151 = scmp.le.s32.totalorder 1, %s11
      %p152 = scmp.lt.s32.totalorder %s11, 4
      %p153 = pnand %p151, %p152
      %p154 = pneg %p153
      // Predicated region
      $region25: #{tpu_custom_call.1} parent=5 // pred_check
        _
      $region26: #{tpu_custom_call.1} parent=5 // pred_check_branch
        %156 = sbr.rel (%p153) target = $region28
      $region27: #{tpu_custom_call.1} parent=5 // pred_region
        %s157 = ssub.s32 %s11, 1
        %s158 = sand.u32 %s38, 1
        %s159 = scalar_lea.sflag [#allocation5], %s158
        %s160 = sand.u32 %s38, 1
        %s161 = smul.addr %s160, 256
        %s162 = scalar_lea.vmem [#allocation4], %s161
        // Predicated region
        $region29: #{tpu_custom_call.1} parent=27 // pred_check
          %p163 = pneg %p51
        $region30: #{tpu_custom_call.1} parent=27 // pred_check_branch
          %165 = sbr.rel (%p163) target = $region32
        $region31: #{tpu_custom_call.1} parent=27 // pred_region
          %166 = dma.done %s159, 4096
        $region32: #{tpu_custom_call.1} parent=27 // pred_fallthru
          _
        %s167 = sand.u32 %s38, 1
        %s168 = scalar_lea.sflag [#allocation5], %s167
        %s169 = sand.u32 %s38, 1
        %s170 = smul.addr %s169, 256
        %s171 = scalar_lea.vmem [#allocation4], %s170
        %p172 = pneg %p51
        %p173 = pneg %p48
        %p174 = pneg %p72
        %p175 = pneg %p69
        %p176 = pneg %p98
        %p177 = pneg %p95
        %s178 = smul.u32 2, %s20
        %p179 = scmp.lt.s32.totalorder %s178, 1
        %s180 = scalar_select %p179, %s178, 1
        %s181 = smul.addr %s180, 16
        %s182 = smul.addr %s181, 8
        %s183 = scalar_lea.vmem %s2, %s182
        %s184 = smul.u32 2, %s20
        %s185 = smul.u32 2, %s21
        %s186 = ssub.s32 5, %s185
        %p187 = scmp.lt.s32.totalorder %s186, 2
        %s188 = scalar_select %p187, %s186, 2
        %s189 = smul.u32 2048, %s188
        %s190 = smul.u32 2, %s20
        %p191 = scmp.lt.s32.totalorder %s190, 1
        %s192 = scalar_select %p191, %s190, 1
        %s193 = smul.addr %s192, 16
        %s194 = smul.addr %s193, 8
        %s195 = scalar_lea.vmem %s2, %s194
        %s196 = smul.u32 2, %s20
        %p197 = scmp.eq.s32.totalorder %s21, 0
        // Predicated region
        $region33: #{tpu_custom_call.1} parent=27 // pred_check
          %p198 = pneg %p197
        $region34: #{tpu_custom_call.1} parent=27 // pred_check_branch
          %200 = sbr.rel (%p198) target = $region36
        $region35: #{tpu_custom_call.1} parent=27 // pred_region
          %vm201 = vcmask 7168
          %202 = vst.msk [vmem:[#allocation2] sm:$0xff] %vm201, 0.0
          %203 = vst.msk [vmem:[#allocation2 + $0x8] sm:$0xff] %vm201, 0.0
          %204 = vst.msk [vmem:[#allocation2 + $0x10] sm:$0xff] %vm201, 0.0
          %205 = vst.msk [vmem:[#allocation2 + $0x18] sm:$0xff] %vm201, 0.0
          %206 = vst.msk [vmem:[#allocation2 + $0x20] sm:$0xff] %vm201, 0.0
          %207 = vst.msk [vmem:[#allocation2 + $0x28] sm:$0xff] %vm201, 0.0
          %208 = vst.msk [vmem:[#allocation2 + $0x30] sm:$0xff] %vm201, 0.0
          %209 = vst.msk [vmem:[#allocation2 + $0x38] sm:$0xff] %vm201, 0.0
          %210 = vst.msk [vmem:[#allocation2 + $0x40] sm:$0xff] %vm201, 0.0
          %211 = vst.msk [vmem:[#allocation2 + $0x48] sm:$0xff] %vm201, 0.0
          %212 = vst.msk [vmem:[#allocation2 + $0x50] sm:$0xff] %vm201, 0.0
          %213 = vst.msk [vmem:[#allocation2 + $0x58] sm:$0xff] %vm201, 0.0
          %214 = vst.msk [vmem:[#allocation2 + $0x60] sm:$0xff] %vm201, 0.0
          %215 = vst.msk [vmem:[#allocation2 + $0x68] sm:$0xff] %vm201, 0.0
          %216 = vst.msk [vmem:[#allocation2 + $0x70] sm:$0xff] %vm201, 0.0
          %217 = vst.msk [vmem:[#allocation2 + $0x78] sm:$0xff] %vm201, 0.0
          %218 = vst.msk [vmem:[#allocation2 + $0x80] sm:$0xff] %vm201, 0.0
          %219 = vst.msk [vmem:[#allocation2 + $0x88] sm:$0xff] %vm201, 0.0
          %220 = vst.msk [vmem:[#allocation2 + $0x90] sm:$0xff] %vm201, 0.0
          %221 = vst.msk [vmem:[#allocation2 + $0x98] sm:$0xff] %vm201, 0.0
          %222 = vst.msk [vmem:[#allocation2 + $0xa0] sm:$0xff] %vm201, 0.0
          %223 = vst.msk [vmem:[#allocation2 + $0xa8] sm:$0xff] %vm201, 0.0
          %224 = vst.msk [vmem:[#allocation2 + $0xb0] sm:$0xff] %vm201, 0.0
          %225 = vst.msk [vmem:[#allocation2 + $0xb8] sm:$0xff] %vm201, 0.0
          %226 = vst.msk [vmem:[#allocation2 + $0xc0] sm:$0xff] %vm201, 0.0
          %227 = vst.msk [vmem:[#allocation2 + $0xc8] sm:$0xff] %vm201, 0.0
          %228 = vst.msk [vmem:[#allocation2 + $0xd0] sm:$0xff] %vm201, 0.0
          %229 = vst.msk [vmem:[#allocation2 + $0xd8] sm:$0xff] %vm201, 0.0
          %230 = vst.msk [vmem:[#allocation2 + $0xe0] sm:$0xff] %vm201, 0.0
          %231 = vst.msk [vmem:[#allocation2 + $0xe8] sm:$0xff] %vm201, 0.0
          %232 = vst.msk [vmem:[#allocation2 + $0xf0] sm:$0xff] %vm201, 0.0
          %233 = vst.msk [vmem:[#allocation2 + $0xf8] sm:$0xff] %vm201, 0.0
          %234 = vst.msk [vmem:[#allocation3] sm:$0xff] %vm201, -inf
          %235 = vst.msk [vmem:[#allocation3 + $0x8] sm:$0xff] %vm201, -inf
          %236 = vst.msk [vmem:[#allocation3 + $0x10] sm:$0xff] %vm201, -inf
          %237 = vst.msk [vmem:[#allocation3 + $0x18] sm:$0xff] %vm201, -inf
          %238 = vst.msk [vmem:[#allocation3 + $0x20] sm:$0xff] %vm201, -inf
          %239 = vst.msk [vmem:[#allocation3 + $0x28] sm:$0xff] %vm201, -inf
          %240 = vst.msk [vmem:[#allocation3 + $0x30] sm:$0xff] %vm201, -inf
          %241 = vst.msk [vmem:[#allocation3 + $0x38] sm:$0xff] %vm201, -inf
          %242 = vst.msk [vmem:[#allocation3 + $0x40] sm:$0xff] %vm201, -inf
          %243 = vst.msk [vmem:[#allocation3 + $0x48] sm:$0xff] %vm201, -inf
          %244 = vst.msk [vmem:[#allocation3 + $0x50] sm:$0xff] %vm201, -inf
          %245 = vst.msk [vmem:[#allocation3 + $0x58] sm:$0xff] %vm201, -inf
          %246 = vst.msk [vmem:[#allocation3 + $0x60] sm:$0xff] %vm201, -inf
          %247 = vst.msk [vmem:[#allocation3 + $0x68] sm:$0xff] %vm201, -inf
          %248 = vst.msk [vmem:[#allocation3 + $0x70] sm:$0xff] %vm201, -inf
          %249 = vst.msk [vmem:[#allocation3 + $0x78] sm:$0xff] %vm201, -inf
          %250 = vst.msk [vmem:[#allocation3 + $0x80] sm:$0xff] %vm201, -inf
          %251 = vst.msk [vmem:[#allocation3 + $0x88] sm:$0xff] %vm201, -inf
          %252 = vst.msk [vmem:[#allocation3 + $0x90] sm:$0xff] %vm201, -inf
          %253 = vst.msk [vmem:[#allocation3 + $0x98] sm:$0xff] %vm201, -inf
          %254 = vst.msk [vmem:[#allocation3 + $0xa0] sm:$0xff] %vm201, -inf
          %255 = vst.msk [vmem:[#allocation3 + $0xa8] sm:$0xff] %vm201, -inf
          %256 = vst.msk [vmem:[#allocation3 + $0xb0] sm:$0xff] %vm201, -inf
          %257 = vst.msk [vmem:[#allocation3 + $0xb8] sm:$0xff] %vm201, -inf
          %258 = vst.msk [vmem:[#allocation3 + $0xc0] sm:$0xff] %vm201, -inf
          %259 = vst.msk [vmem:[#allocation3 + $0xc8] sm:$0xff] %vm201, -inf
          %260 = vst.msk [vmem:[#allocation3 + $0xd0] sm:$0xff] %vm201, -inf
          %261 = vst.msk [vmem:[#allocation3 + $0xd8] sm:$0xff] %vm201, -inf
          %262 = vst.msk [vmem:[#allocation3 + $0xe0] sm:$0xff] %vm201, -inf
          %263 = vst.msk [vmem:[#allocation3 + $0xe8] sm:$0xff] %vm201, -inf
          %264 = vst.msk [vmem:[#allocation3 + $0xf0] sm:$0xff] %vm201, -inf
          %265 = vst.msk [vmem:[#allocation3 + $0xf8] sm:$0xff] %vm201, -inf
        $region36: #{tpu_custom_call.1} parent=27 // pred_fallthru
          _
        %v266 = vld [vmem:[%s1] sm:$0xff]
        %v267 = vld [vmem:[%s1 + $0x8] sm:$0xff]
        %v268 = vld [vmem:[%s1 + $0x10] sm:$0xff]
        %v269 = vld [vmem:[%s1 + $0x18] sm:$0xff]
        %v270 = vld [vmem:[%s1 + $0x20] sm:$0xff]
        %v271 = vld [vmem:[%s1 + $0x28] sm:$0xff]
        %v272 = vld [vmem:[%s1 + $0x30] sm:$0xff]
        %v273 = vld [vmem:[%s1 + $0x38] sm:$0xff]
        %v274 = vld [vmem:[%s1 + $0x40] sm:$0xff]
        %v275 = vld [vmem:[%s1 + $0x48] sm:$0xff]
        %v276 = vld [vmem:[%s1 + $0x50] sm:$0xff]
        %v277 = vld [vmem:[%s1 + $0x58] sm:$0xff]
        %v278 = vld [vmem:[%s1 + $0x60] sm:$0xff]
        %v279 = vld [vmem:[%s1 + $0x68] sm:$0xff]
        %v280 = vld [vmem:[%s1 + $0x70] sm:$0xff]
        %v281 = vld [vmem:[%s1 + $0x78] sm:$0xff]
        %v282 = vlaneseq
        %v283 = vand.u32 %v282, 127
        %v284 = vadd.s32 %v283, 128
        %s285 = smul.u32 %s21, 256
        %v286 = vstv %s285
        %v287 = vadd.s32 %v283, %v286
        %v288 = vadd.s32 %v284, %v286
        %vm289 = vcmp.lt.s32.totalorder %v287, 576
        %vm290 = vcmp.lt.s32.totalorder %v288, 576
        %v291 = vld [vmem:[%s162] sm:$0xff]
        %v292 = vld [vmem:[%s162 + $0x8] sm:$0xff]
        %v293 = vld [vmem:[%s162 + $0x10] sm:$0xff]
        %v294 = vld [vmem:[%s162 + $0x18] sm:$0xff]
        %v295 = vld [vmem:[%s162 + $0x20] sm:$0xff]
        %v296 = vld [vmem:[%s162 + $0x28] sm:$0xff]
        %v297 = vld [vmem:[%s162 + $0x30] sm:$0xff]
        %v298 = vld [vmem:[%s162 + $0x38] sm:$0xff]
        %v299 = vld [vmem:[%s162 + $0x40] sm:$0xff]
        %v300 = vld [vmem:[%s162 + $0x48] sm:$0xff]
        %v301 = vld [vmem:[%s162 + $0x50] sm:$0xff]
        %v302 = vld [vmem:[%s162 + $0x58] sm:$0xff]
        %v303 = vld [vmem:[%s162 + $0x60] sm:$0xff]
        %v304 = vld [vmem:[%s162 + $0x68] sm:$0xff]
        %v305 = vld [vmem:[%s162 + $0x70] sm:$0xff]
        %v306 = vld [vmem:[%s162 + $0x78] sm:$0xff]
        %vm307 = vcmask 523264
        %v309 = vsel %vm307, %v266, 0
        %v312 = vsel %vm307, %v267, 0
        %v315 = vsel %vm307, %v268, 0
        %v318 = vsel %vm307, %v269, 0
        %v321 = vsel %vm307, %v270, 0
        %v324 = vsel %vm307, %v271, 0
        %v327 = vsel %vm307, %v272, 0
        %v330 = vsel %vm307, %v273, 0
        %v333 = vsel %vm307, %v274, 0
        %v336 = vsel %vm307, %v275, 0
        %v339 = vsel %vm307, %v276, 0
        %v342 = vsel %vm307, %v277, 0
        %v345 = vsel %vm307, %v278, 0
        %v348 = vsel %vm307, %v279, 0
        %v351 = vsel %vm307, %v280, 0
        %v354 = vsel %vm307, %v281, 0
        %356 = vmatprep.subr.mxu0 %v292
        %357 = vmatpush1.msra.mxu0 %v291
        %358 = vmatprep.subr.mxu0 %v294
        %359 = vmatpush1.msra.mxu0 %v293
        %360 = vmatprep.subr.mxu0 %v296
        %361 = vmatpush1.msra.mxu0 %v295
        %362 = vmatprep.subr.mxu0 %v298
        %363 = vmatpush1.msra.mxu0 %v297
        %364 = vmatprep.subr.mxu0 %v300
        %365 = vmatpush1.msra.mxu0 %v299
        %366 = vmatprep.subr.mxu0 %v302
        %367 = vmatpush1.msra.mxu0 %v301
        %368 = vmatprep.subr.mxu0 %v304
        %369 = vmatpush1.msra.mxu0 %v303
        %370 = vmatprep.subr.mxu0 %v306
        %371 = vmatpush1.msra.mxu0 %v305
        %372 = vmatprep.subr.mxu0 0.0
        %373 = vmatpush1.msra.mxu0 0.0
        %374 = vmatprep.subr.mxu0 0.0
        %375 = vmatpush1.msra.mxu0 0.0
        %376 = vmatprep.subr.mxu0 0.0
        %377 = vmatpush1.msra.mxu0 0.0
        %378 = vmatprep.subr.mxu0 0.0
        %379 = vmatpush1.msra.mxu0 0.0
        %380 = vmatprep.subr.mxu0 0.0
        %381 = vmatpush1.msra.mxu0 0.0
        %382 = vmatprep.subr.mxu0 0.0
        %383 = vmatpush1.msra.mxu0 0.0
        %384 = vmatprep.subr.mxu0 0.0
        %385 = vmatpush1.msra.mxu0 0.0
        %386 = vmatprep.subr.mxu0 0.0
        %387 = vmatpush1.msra.mxu0 0.0
        %388 = vmatprep.subr.mxu0 0.0
        %389 = vmatpush1.msra.mxu0 0.0
        %390 = vmatprep.subr.mxu0 0.0
        %391 = vmatpush1.msra.mxu0 0.0
        %392 = vmatprep.subr.mxu0 0.0
        %393 = vmatpush1.msra.mxu0 0.0
        %394 = vmatprep.subr.mxu0 0.0
        %395 = vmatpush1.msra.mxu0 0.0
        %396 = vmatprep.subr.mxu0 0.0
        %397 = vmatpush1.msra.mxu0 0.0
        %398 = vmatprep.subr.mxu0 0.0
        %399 = vmatpush1.msra.mxu0 0.0
        %400 = vmatprep.subr.mxu0 0.0
        %401 = vmatpush1.msra.mxu0 0.0
        %402 = vmatprep.subr.mxu0 0.0
        %403 = vmatpush1.msra.mxu0 0.0
        %404 = vmatprep.subr.mxu0 0.0
        %405 = vmatpush1.msra.mxu0 0.0
        %406 = vmatprep.subr.mxu0 0.0
        %407 = vmatpush1.msra.mxu0 0.0
        %408 = vmatprep.subr.mxu0 0.0
        %409 = vmatpush1.msra.mxu0 0.0
        %410 = vmatprep.subr.mxu0 0.0
        %411 = vmatpush1.msra.mxu0 0.0
        %412 = vmatprep.subr.mxu0 0.0
        %413 = vmatpush1.msra.mxu0 0.0
        %414 = vmatprep.subr.mxu0 0.0
        %415 = vmatpush1.msra.mxu0 0.0
        %416 = vmatprep.subr.mxu0 0.0
        %417 = vmatpush1.msra.mxu0 0.0
        %418 = vmatprep.subr.mxu0 0.0
        %419 = vmatpush1.msra.mxu0 0.0
        %420 = vmatprep.mubr.f32.mxu0 0.0
        %421 = vmatmul.mubr.f32.gmra.mrb[0].mxu0 %v309
        %v422 = vpop.f32.mrb[0].mxu0
        %v423 = vadd.f32 0.0, %v422
        %v424 = vpop.f32.mrb[0].mxu0
        %v425 = vadd.f32 0.0, %v424
        %426 = vmatprep.mubr.f32.mxu0 0.0
        %427 = vmatmul.mubr.f32.gmra.mrb[0].mxu0 %v312
        %v428 = vpop.f32.mrb[0].mxu0
        %v429 = vadd.f32 0.0, %v428
        %v430 = vpop.f32.mrb[0].mxu0
        %v431 = vadd.f32 0.0, %v430
        %432 = vmatprep.mubr.f32.mxu0 0.0
        %433 = vmatmul.mubr.f32.gmra.mrb[0].mxu0 %v315
        %v434 = vpop.f32.mrb[0].mxu0
        %v435 = vadd.f32 0.0, %v434
        %v436 = vpop.f32.mrb[0].mxu0
        %v437 = vadd.f32 0.0, %v436
        %438 = vmatprep.mubr.f32.mxu0 0.0
        %439 = vmatmul.mubr.f32.gmra.mrb[0].mxu0 %v318
        %v440 = vpop.f32.mrb[0].mxu0
        %v441 = vadd.f32 0.0, %v440
        %v442 = vpop.f32.mrb[0].mxu0
        %v443 = vadd.f32 0.0, %v442
        %444 = vmatprep.mubr.f32.mxu0 0.0
        %445 = vmatmul.mubr.f32.gmra.mrb[0].mxu0 %v321
        %v446 = vpop.f32.mrb[0].mxu0
        %v447 = vadd.f32 0.0, %v446
        %v448 = vpop.f32.mrb[0].mxu0
        %v449 = vadd.f32 0.0, %v448
        %450 = vmatprep.mubr.f32.mxu0 0.0
        %451 = vmatmul.mubr.f32.gmra.mrb[0].mxu0 %v324
        %v452 = vpop.f32.mrb[0].mxu0
        %v453 = vadd.f32 0.0, %v452
        %v454 = vpop.f32.mrb[0].mxu0
        %v455 = vadd.f32 0.0, %v454
        %456 = vmatprep.mubr.f32.mxu0 0.0
        %457 = vmatmul.mubr.f32.gmra.mrb[0].mxu0 %v327
        %v458 = vpop.f32.mrb[0].mxu0
        %v459 = vadd.f32 0.0, %v458
        %v460 = vpop.f32.mrb[0].mxu0
        %v461 = vadd.f32 0.0, %v460
        %462 = vmatprep.mubr.f32.mxu0 0.0
        %463 = vmatmul.mubr.f32.gmra.mrb[0].mxu0 %v330
        %v464 = vpop.f32.mrb[0].mxu0
        %v465 = vadd.f32 0.0, %v464
        %v466 = vpop.f32.mrb[0].mxu0
        %v467 = vadd.f32 0.0, %v466
        %468 = vmatprep.mubr.f32.mxu0 0.0
        %469 = vmatmul.mubr.f32.gmra.mrb[0].mxu0 %v333
        %v470 = vpop.f32.mrb[0].mxu0
        %v471 = vadd.f32 0.0, %v470
        %v472 = vpop.f32.mrb[0].mxu0
        %v473 = vadd.f32 0.0, %v472
        %474 = vmatprep.mubr.f32.mxu0 0.0
        %475 = vmatmul.mubr.f32.gmra.mrb[0].mxu0 %v336
        %v476 = vpop.f32.mrb[0].mxu0
        %v477 = vadd.f32 0.0, %v476
        %v478 = vpop.f32.mrb[0].mxu0
        %v479 = vadd.f32 0.0, %v478
        %480 = vmatprep.mubr.f32.mxu0 0.0
        %481 = vmatmul.mubr.f32.gmra.mrb[0].mxu0 %v339
        %v482 = vpop.f32.mrb[0].mxu0
        %v483 = vadd.f32 0.0, %v482
        %v484 = vpop.f32.mrb[0].mxu0
        %v485 = vadd.f32 0.0, %v484
        %486 = vmatprep.mubr.f32.mxu0 0.0
        %487 = vmatmul.mubr.f32.gmra.mrb[0].mxu0 %v342
        %v488 = vpop.f32.mrb[0].mxu0
        %v489 = vadd.f32 0.0, %v488
        %v490 = vpop.f32.mrb[0].mxu0
        %v491 = vadd.f32 0.0, %v490
        %492 = vmatprep.mubr.f32.mxu0 0.0
        %493 = vmatmul.mubr.f32.gmra.mrb[0].mxu0 %v345
        %v494 = vpop.f32.mrb[0].mxu0
        %v495 = vadd.f32 0.0, %v494
        %v496 = vpop.f32.mrb[0].mxu0
        %v497 = vadd.f32 0.0, %v496
        %498 = vmatprep.mubr.f32.mxu0 0.0
        %499 = vmatmul.mubr.f32.gmra.mrb[0].mxu0 %v348
        %v500 = vpop.f32.mrb[0].mxu0
        %v501 = vadd.f32 0.0, %v500
        %v502 = vpop.f32.mrb[0].mxu0
        %v503 = vadd.f32 0.0, %v502
        %504 = vmatprep.mubr.f32.mxu0 0.0
        %505 = vmatmul.mubr.f32.gmra.mrb[0].mxu0 %v351
        %v506 = vpop.f32.mrb[0].mxu0
        %v507 = vadd.f32 0.0, %v506
        %v508 = vpop.f32.mrb[0].mxu0
        %v509 = vadd.f32 0.0, %v508
        %510 = vmatprep.mubr.f32.mxu0 0.0
        %511 = vmatmul.mubr.f32.gmra.mrb[0].mxu0 %v354
        %v512 = vpop.f32.mrb[0].mxu0
        %v513 = vadd.f32 0.0, %v512
        %v514 = vpop.f32.mrb[0].mxu0
        %v515 = vadd.f32 0.0, %v514
        %516 = vdwg.mxu0
        %v517 = vsel %vm289, 1, 0
        %v518 = vsel %vm290, 1, 0
        %vm519 = vcmp.eq.s32.totalorder %v517, 1
        %vm520 = vcmp.eq.s32.totalorder %v518, 1
        %v521 = vsel %vm519, %v423, 0.0
        %v522 = vsel %vm520, %v425, 0.0
        %v523 = vsel %vm519, %v429, 0.0
        %v524 = vsel %vm520, %v431, 0.0
        %v525 = vsel %vm519, %v435, 0.0
        %v526 = vsel %vm520, %v437, 0.0
        %v527 = vsel %vm519, %v441, 0.0
        %v528 = vsel %vm520, %v443, 0.0
        %v529 = vsel %vm519, %v447, 0.0
        %v530 = vsel %vm520, %v449, 0.0
        %v531 = vsel %vm519, %v453, 0.0
        %v532 = vsel %vm520, %v455, 0.0
        %v533 = vsel %vm519, %v459, 0.0
        %v534 = vsel %vm520, %v461, 0.0
        %v535 = vsel %vm519, %v465, 0.0
        %v536 = vsel %vm520, %v467, 0.0
        %v537 = vsel %vm519, %v471, 0.0
        %v538 = vsel %vm520, %v473, 0.0
        %v539 = vsel %vm519, %v477, 0.0
        %v540 = vsel %vm520, %v479, 0.0
        %v541 = vsel %vm519, %v483, 0.0
        %v542 = vsel %vm520, %v485, 0.0
        %v543 = vsel %vm519, %v489, 0.0
        %v544 = vsel %vm520, %v491, 0.0
        %v545 = vsel %vm519, %v495, 0.0
        %v546 = vsel %vm520, %v497, 0.0
        %v547 = vsel %vm519, %v501, 0.0
        %v548 = vsel %vm520, %v503, 0.0
        %v549 = vsel %vm519, %v507, 0.0
        %v550 = vsel %vm520, %v509, 0.0
        %v551 = vsel %vm519, %v513, 0.0
        %v552 = vsel %vm520, %v515, 0.0
        %v553 = vsel %vm519, %v423, -inf
        %v554 = vsel %vm520, %v425, -inf
        %v555 = vsel %vm519, %v429, -inf
        %v556 = vsel %vm520, %v431, -inf
        %v557 = vsel %vm519, %v435, -inf
        %v558 = vsel %vm520, %v437, -inf
        %v559 = vsel %vm519, %v441, -inf
        %v560 = vsel %vm520, %v443, -inf
        %v561 = vsel %vm519, %v447, -inf
        %v562 = vsel %vm520, %v449, -inf
        %v563 = vsel %vm519, %v453, -inf
        %v564 = vsel %vm520, %v455, -inf
        %v565 = vsel %vm519, %v459, -inf
        %v566 = vsel %vm520, %v461, -inf
        %v567 = vsel %vm519, %v465, -inf
        %v568 = vsel %vm520, %v467, -inf
        %v569 = vsel %vm519, %v471, -inf
        %v570 = vsel %vm520, %v473, -inf
        %v571 = vsel %vm519, %v477, -inf
        %v572 = vsel %vm520, %v479, -inf
        %v573 = vsel %vm519, %v483, -inf
        %v574 = vsel %vm520, %v485, -inf
        %v575 = vsel %vm519, %v489, -inf
        %v576 = vsel %vm520, %v491, -inf
        %v577 = vsel %vm519, %v495, -inf
        %v578 = vsel %vm520, %v497, -inf
        %v579 = vsel %vm519, %v501, -inf
        %v580 = vsel %vm520, %v503, -inf
        %v581 = vsel %vm519, %v507, -inf
        %v582 = vsel %vm520, %v509, -inf
        %v583 = vsel %vm519, %v513, -inf
        %v584 = vsel %vm520, %v515, -inf
        %v585 = vld [vmem:[#allocation2] sm:$0xff]
        %v586 = vld [vmem:[#allocation2 + $0x8] sm:$0xff]
        %v587 = vld [vmem:[#allocation2 + $0x10] sm:$0xff]
        %v588 = vld [vmem:[#allocation2 + $0x18] sm:$0xff]
        %v589 = vld [vmem:[#allocation2 + $0x20] sm:$0xff]
        %v590 = vld [vmem:[#allocation2 + $0x28] sm:$0xff]
        %v591 = vld [vmem:[#allocation2 + $0x30] sm:$0xff]
        %v592 = vld [vmem:[#allocation2 + $0x38] sm:$0xff]
        %v593 = vld [vmem:[#allocation2 + $0x40] sm:$0xff]
        %v594 = vld [vmem:[#allocation2 + $0x48] sm:$0xff]
        %v595 = vld [vmem:[#allocation2 + $0x50] sm:$0xff]
        %v596 = vld [vmem:[#allocation2 + $0x58] sm:$0xff]
        %v597 = vld [vmem:[#allocation2 + $0x60] sm:$0xff]
        %v598 = vld [vmem:[#allocation2 + $0x68] sm:$0xff]
        %v599 = vld [vmem:[#allocation2 + $0x70] sm:$0xff]
        %v600 = vld [vmem:[#allocation2 + $0x78] sm:$0xff]
        %v601 = vadd.f32 %v521, %v522
        %602 = vadd.xlane.f32.xlu0 %v601
        %v603 = vpop.xlane.xlu0 %602
        %v604 = vadd.f32 %v523, %v524
        %605 = vadd.xlane.f32.xlu0 %v604
        %v606 = vpop.xlane.xlu0 %605
        %v607 = vadd.f32 %v525, %v526
        %608 = vadd.xlane.f32.xlu0 %v607
        %v609 = vpop.xlane.xlu0 %608
        %v610 = vadd.f32 %v527, %v528
        %611 = vadd.xlane.f32.xlu0 %v610
        %v612 = vpop.xlane.xlu0 %611
        %v613 = vadd.f32 %v529, %v530
        %614 = vadd.xlane.f32.xlu0 %v613
        %v615 = vpop.xlane.xlu0 %614
        %v616 = vadd.f32 %v531, %v532
        %617 = vadd.xlane.f32.xlu0 %v616
        %v618 = vpop.xlane.xlu0 %617
        %v619 = vadd.f32 %v533, %v534
        %620 = vadd.xlane.f32.xlu0 %v619
        %v621 = vpop.xlane.xlu0 %620
        %v622 = vadd.f32 %v535, %v536
        %623 = vadd.xlane.f32.xlu0 %v622
        %v624 = vpop.xlane.xlu0 %623
        %v625 = vadd.f32 %v537, %v538
        %626 = vadd.xlane.f32.xlu0 %v625
        %v627 = vpop.xlane.xlu0 %626
        %v628 = vadd.f32 %v539, %v540
        %629 = vadd.xlane.f32.xlu0 %v628
        %v630 = vpop.xlane.xlu0 %629
        %v631 = vadd.f32 %v541, %v542
        %632 = vadd.xlane.f32.xlu0 %v631
        %v633 = vpop.xlane.xlu0 %632
        %v634 = vadd.f32 %v543, %v544
        %635 = vadd.xlane.f32.xlu0 %v634
        %v636 = vpop.xlane.xlu0 %635
        %v637 = vadd.f32 %v545, %v546
        %638 = vadd.xlane.f32.xlu0 %v637
        %v639 = vpop.xlane.xlu0 %638
        %v640 = vadd.f32 %v547, %v548
        %641 = vadd.xlane.f32.xlu0 %v640
        %v642 = vpop.xlane.xlu0 %641
        %v643 = vadd.f32 %v549, %v550
        %644 = vadd.xlane.f32.xlu0 %v643
        %v645 = vpop.xlane.xlu0 %644
        %v646 = vadd.f32 %v551, %v552
        %647 = vadd.xlane.f32.xlu0 %v646
        %v648 = vpop.xlane.xlu0 %647
        %v649 = vadd.f32 %v585, %v603
        %v650 = vadd.f32 %v586, %v606
        %v651 = vadd.f32 %v587, %v609
        %v652 = vadd.f32 %v588, %v612
        %v653 = vadd.f32 %v589, %v615
        %v654 = vadd.f32 %v590, %v618
        %v655 = vadd.f32 %v591, %v621
        %v656 = vadd.f32 %v592, %v624
        %v657 = vadd.f32 %v593, %v627
        %v658 = vadd.f32 %v594, %v630
        %v659 = vadd.f32 %v595, %v633
        %v660 = vadd.f32 %v596, %v636
        %v661 = vadd.f32 %v597, %v639
        %v662 = vadd.f32 %v598, %v642
        %v663 = vadd.f32 %v599, %v645
        %v664 = vadd.f32 %v600, %v648
        %vm665 = vcmask 7168
        %666 = vst.msk [vmem:[#allocation2] sm:$0xff] %vm665, %v649
        %667 = vst.msk [vmem:[#allocation2 + $0x8] sm:$0xff] %vm665, %v650
        %668 = vst.msk [vmem:[#allocation2 + $0x10] sm:$0xff] %vm665, %v651
        %669 = vst.msk [vmem:[#allocation2 + $0x18] sm:$0xff] %vm665, %v652
        %670 = vst.msk [vmem:[#allocation2 + $0x20] sm:$0xff] %vm665, %v653
        %671 = vst.msk [vmem:[#allocation2 + $0x28] sm:$0xff] %vm665, %v654
        %672 = vst.msk [vmem:[#allocation2 + $0x30] sm:$0xff] %vm665, %v655
        %673 = vst.msk [vmem:[#allocation2 + $0x38] sm:$0xff] %vm665, %v656
        %674 = vst.msk [vmem:[#allocation2 + $0x40] sm:$0xff] %vm665, %v657
        %675 = vst.msk [vmem:[#allocation2 + $0x48] sm:$0xff] %vm665, %v658
        %676 = vst.msk [vmem:[#allocation2 + $0x50] sm:$0xff] %vm665, %v659
        %677 = vst.msk [vmem:[#allocation2 + $0x58] sm:$0xff] %vm665, %v660
        %678 = vst.msk [vmem:[#allocation2 + $0x60] sm:$0xff] %vm665, %v661
        %679 = vst.msk [vmem:[#allocation2 + $0x68] sm:$0xff] %vm665, %v662
        %680 = vst.msk [vmem:[#allocation2 + $0x70] sm:$0xff] %vm665, %v663
        %681 = vst.msk [vmem:[#allocation2 + $0x78] sm:$0xff] %vm665, %v664
        %v682 = vld [vmem:[#allocation3] sm:$0xff]
        %v683 = vld [vmem:[#allocation3 + $0x8] sm:$0xff]
        %v684 = vld [vmem:[#allocation3 + $0x10] sm:$0xff]
        %v685 = vld [vmem:[#allocation3 + $0x18] sm:$0xff]
        %v686 = vld [vmem:[#allocation3 + $0x20] sm:$0xff]
        %v687 = vld [vmem:[#allocation3 + $0x28] sm:$0xff]
        %v688 = vld [vmem:[#allocation3 + $0x30] sm:$0xff]
        %v689 = vld [vmem:[#allocation3 + $0x38] sm:$0xff]
        %v690 = vld [vmem:[#allocation3 + $0x40] sm:$0xff]
        %v691 = vld [vmem:[#allocation3 + $0x48] sm:$0xff]
        %v692 = vld [vmem:[#allocation3 + $0x50] sm:$0xff]
        %v693 = vld [vmem:[#allocation3 + $0x58] sm:$0xff]
        %v694 = vld [vmem:[#allocation3 + $0x60] sm:$0xff]
        %v695 = vld [vmem:[#allocation3 + $0x68] sm:$0xff]
        %v696 = vld [vmem:[#allocation3 + $0x70] sm:$0xff]
        %v697 = vld [vmem:[#allocation3 + $0x78] sm:$0xff]
        %v698 = vmax.f32 %v553, %v554
        %699 = vmax.xlane.f32.xlu0 %v698
        %v700 = vpop.xlane.xlu0 %699
        %v701 = vmax.f32 %v555, %v556
        %702 = vmax.xlane.f32.xlu0 %v701
        %v703 = vpop.xlane.xlu0 %702
        %v704 = vmax.f32 %v557, %v558
        %705 = vmax.xlane.f32.xlu0 %v704
        %v706 = vpop.xlane.xlu0 %705
        %v707 = vmax.f32 %v559, %v560
        %708 = vmax.xlane.f32.xlu0 %v707
        %v709 = vpop.xlane.xlu0 %708
        %v710 = vmax.f32 %v561, %v562
        %711 = vmax.xlane.f32.xlu0 %v710
        %v712 = vpop.xlane.xlu0 %711
        %v713 = vmax.f32 %v563, %v564
        %714 = vmax.xlane.f32.xlu0 %v713
        %v715 = vpop.xlane.xlu0 %714
        %v716 = vmax.f32 %v565, %v566
        %717 = vmax.xlane.f32.xlu0 %v716
        %v718 = vpop.xlane.xlu0 %717
        %v719 = vmax.f32 %v567, %v568
        %720 = vmax.xlane.f32.xlu0 %v719
        %v721 = vpop.xlane.xlu0 %720
        %v722 = vmax.f32 %v569, %v570
        %723 = vmax.xlane.f32.xlu0 %v722
        %v724 = vpop.xlane.xlu0 %723
        %v725 = vmax.f32 %v571, %v572
        %726 = vmax.xlane.f32.xlu0 %v725
        %v727 = vpop.xlane.xlu0 %726
        %v728 = vmax.f32 %v573, %v574
        %729 = vmax.xlane.f32.xlu0 %v728
        %v730 = vpop.xlane.xlu0 %729
        %v731 = vmax.f32 %v575, %v576
        %732 = vmax.xlane.f32.xlu0 %v731
        %v733 = vpop.xlane.xlu0 %732
        %v734 = vmax.f32 %v577, %v578
        %735 = vmax.xlane.f32.xlu0 %v734
        %v736 = vpop.xlane.xlu0 %735
        %v737 = vmax.f32 %v579, %v580
        %738 = vmax.xlane.f32.xlu0 %v737
        %v739 = vpop.xlane.xlu0 %738
        %v740 = vmax.f32 %v581, %v582
        %741 = vmax.xlane.f32.xlu0 %v740
        %v742 = vpop.xlane.xlu0 %741
        %v743 = vmax.f32 %v583, %v584
        %744 = vmax.xlane.f32.xlu0 %v743
        %v745 = vpop.xlane.xlu0 %744
        %v746 = vmax.f32 %v682, %v700
        %v747 = vmax.f32 %v683, %v703
        %v748 = vmax.f32 %v684, %v706
        %v749 = vmax.f32 %v685, %v709
        %v750 = vmax.f32 %v686, %v712
        %v751 = vmax.f32 %v687, %v715
        %v752 = vmax.f32 %v688, %v718
        %v753 = vmax.f32 %v689, %v721
        %v754 = vmax.f32 %v690, %v724
        %v755 = vmax.f32 %v691, %v727
        %v756 = vmax.f32 %v692, %v730
        %v757 = vmax.f32 %v693, %v733
        %v758 = vmax.f32 %v694, %v736
        %v759 = vmax.f32 %v695, %v739
        %v760 = vmax.f32 %v696, %v742
        %v761 = vmax.f32 %v697, %v745
        %762 = vst.msk [vmem:[#allocation3] sm:$0xff] %vm665, %v746
        %763 = vst.msk [vmem:[#allocation3 + $0x8] sm:$0xff] %vm665, %v747
        %764 = vst.msk [vmem:[#allocation3 + $0x10] sm:$0xff] %vm665, %v748
        %765 = vst.msk [vmem:[#allocation3 + $0x18] sm:$0xff] %vm665, %v749
        %766 = vst.msk [vmem:[#allocation3 + $0x20] sm:$0xff] %vm665, %v750
        %767 = vst.msk [vmem:[#allocation3 + $0x28] sm:$0xff] %vm665, %v751
        %768 = vst.msk [vmem:[#allocation3 + $0x30] sm:$0xff] %vm665, %v752
        %769 = vst.msk [vmem:[#allocation3 + $0x38] sm:$0xff] %vm665, %v753
        %770 = vst.msk [vmem:[#allocation3 + $0x40] sm:$0xff] %vm665, %v754
        %771 = vst.msk [vmem:[#allocation3 + $0x48] sm:$0xff] %vm665, %v755
        %772 = vst.msk [vmem:[#allocation3 + $0x50] sm:$0xff] %vm665, %v756
        %773 = vst.msk [vmem:[#allocation3 + $0x58] sm:$0xff] %vm665, %v757
        %774 = vst.msk [vmem:[#allocation3 + $0x60] sm:$0xff] %vm665, %v758
        %775 = vst.msk [vmem:[#allocation3 + $0x68] sm:$0xff] %vm665, %v759
        %776 = vst.msk [vmem:[#allocation3 + $0x70] sm:$0xff] %vm665, %v760
        %777 = vst.msk [vmem:[#allocation3 + $0x78] sm:$0xff] %vm665, %v761
        %s778 = scalar_lea.vmem %s162, 128 [#allocation4]
        %v779 = vld [vmem:[%s778] sm:$0xff]
        %v780 = vld [vmem:[%s778 + $0x8] sm:$0xff]
        %v781 = vld [vmem:[%s778 + $0x10] sm:$0xff]
        %v782 = vld [vmem:[%s778 + $0x18] sm:$0xff]
        %v783 = vld [vmem:[%s778 + $0x20] sm:$0xff]
        %v784 = vld [vmem:[%s778 + $0x28] sm:$0xff]
        %v785 = vld [vmem:[%s778 + $0x30] sm:$0xff]
        %v786 = vld [vmem:[%s778 + $0x38] sm:$0xff]
        %v787 = vld [vmem:[%s778 + $0x40] sm:$0xff]
        %v788 = vld [vmem:[%s778 + $0x48] sm:$0xff]
        %v789 = vld [vmem:[%s778 + $0x50] sm:$0xff]
        %v790 = vld [vmem:[%s778 + $0x58] sm:$0xff]
        %v791 = vld [vmem:[%s778 + $0x60] sm:$0xff]
        %v792 = vld [vmem:[%s778 + $0x68] sm:$0xff]
        %v793 = vld [vmem:[%s778 + $0x70] sm:$0xff]
        %v794 = vld [vmem:[%s778 + $0x78] sm:$0xff]
        %795 = vmatprep.subr.mxu0 %v780
        %796 = vmatpush1.msra.mxu0 %v779
        %797 = vmatprep.subr.mxu0 %v782
        %798 = vmatpush1.msra.mxu0 %v781
        %799 = vmatprep.subr.mxu0 %v784
        %800 = vmatpush1.msra.mxu0 %v783
        %801 = vmatprep.subr.mxu0 %v786
        %802 = vmatpush1.msra.mxu0 %v785
        %803 = vmatprep.subr.mxu0 %v788
        %804 = vmatpush1.msra.mxu0 %v787
        %805 = vmatprep.subr.mxu0 %v790
        %806 = vmatpush1.msra.mxu0 %v789
        %807 = vmatprep.subr.mxu0 %v792
        %808 = vmatpush1.msra.mxu0 %v791
        %809 = vmatprep.subr.mxu0 %v794
        %810 = vmatpush1.msra.mxu0 %v793
        %811 = vmatprep.subr.mxu0 0.0
        %812 = vmatpush1.msra.mxu0 0.0
        %813 = vmatprep.subr.mxu0 0.0
        %814 = vmatpush1.msra.mxu0 0.0
        %815 = vmatprep.subr.mxu0 0.0
        %816 = vmatpush1.msra.mxu0 0.0
        %817 = vmatprep.subr.mxu0 0.0
        %818 = vmatpush1.msra.mxu0 0.0
        %819 = vmatprep.subr.mxu0 0.0
        %820 = vmatpush1.msra.mxu0 0.0
        %821 = vmatprep.subr.mxu0 0.0
        %822 = vmatpush1.msra.mxu0 0.0
        %823 = vmatprep.subr.mxu0 0.0
        %824 = vmatpush1.msra.mxu0 0.0
        %825 = vmatprep.subr.mxu0 0.0
        %826 = vmatpush1.msra.mxu0 0.0
        %827 = vmatprep.subr.mxu0 0.0
        %828 = vmatpush1.msra.mxu0 0.0
        %829 = vmatprep.subr.mxu0 0.0
        %830 = vmatpush1.msra.mxu0 0.0
        %831 = vmatprep.subr.mxu0 0.0
        %832 = vmatpush1.msra.mxu0 0.0
        %833 = vmatprep.subr.mxu0 0.0
        %834 = vmatpush1.msra.mxu0 0.0
        %835 = vmatprep.subr.mxu0 0.0
        %836 = vmatpush1.msra.mxu0 0.0
        %837 = vmatprep.subr.mxu0 0.0
        %838 = vmatpush1.msra.mxu0 0.0
        %839 = vmatprep.subr.mxu0 0.0
        %840 = vmatpush1.msra.mxu0 0.0
        %841 = vmatprep.subr.mxu0 0.0
        %842 = vmatpush1.msra.mxu0 0.0
        %843 = vmatprep.subr.mxu0 0.0
        %844 = vmatpush1.msra.mxu0 0.0
        %845 = vmatprep.subr.mxu0 0.0
        %846 = vmatpush1.msra.mxu0 0.0
        %847 = vmatprep.subr.mxu0 0.0
        %848 = vmatpush1.msra.mxu0 0.0
        %849 = vmatprep.subr.mxu0 0.0
        %850 = vmatpush1.msra.mxu0 0.0
        %851 = vmatprep.subr.mxu0 0.0
        %852 = vmatpush1.msra.mxu0 0.0
        %853 = vmatprep.subr.mxu0 0.0
        %854 = vmatpush1.msra.mxu0 0.0
        %855 = vmatprep.subr.mxu0 0.0
        %856 = vmatpush1.msra.mxu0 0.0
        %857 = vmatprep.subr.mxu0 0.0
        %858 = vmatpush1.msra.mxu0 0.0
        %859 = vmatprep.mubr.f32.mxu0 0.0
        %860 = vmatmul.mubr.f32.gmra.mrb[0].mxu0 %v309
        %v861 = vpop.f32.mrb[0].mxu0
        %v862 = vadd.f32 0.0, %v861
        %v863 = vpop.f32.mrb[0].mxu0
        %v864 = vadd.f32 0.0, %v863
        %865 = vmatprep.mubr.f32.mxu0 0.0
        %866 = vmatmul.mubr.f32.gmra.mrb[0].mxu0 %v312
        %v867 = vpop.f32.mrb[0].mxu0
        %v868 = vadd.f32 0.0, %v867
        %v869 = vpop.f32.mrb[0].mxu0
        %v870 = vadd.f32 0.0, %v869
        %871 = vmatprep.mubr.f32.mxu0 0.0
        %872 = vmatmul.mubr.f32.gmra.mrb[0].mxu0 %v315
        %v873 = vpop.f32.mrb[0].mxu0
        %v874 = vadd.f32 0.0, %v873
        %v875 = vpop.f32.mrb[0].mxu0
        %v876 = vadd.f32 0.0, %v875
        %877 = vmatprep.mubr.f32.mxu0 0.0
        %878 = vmatmul.mubr.f32.gmra.mrb[0].mxu0 %v318
        %v879 = vpop.f32.mrb[0].mxu0
        %v880 = vadd.f32 0.0, %v879
        %v881 = vpop.f32.mrb[0].mxu0
        %v882 = vadd.f32 0.0, %v881
        %883 = vmatprep.mubr.f32.mxu0 0.0
        %884 = vmatmul.mubr.f32.gmra.mrb[0].mxu0 %v321
        %v885 = vpop.f32.mrb[0].mxu0
        %v886 = vadd.f32 0.0, %v885
        %v887 = vpop.f32.mrb[0].mxu0
        %v888 = vadd.f32 0.0, %v887
        %889 = vmatprep.mubr.f32.mxu0 0.0
        %890 = vmatmul.mubr.f32.gmra.mrb[0].mxu0 %v324
        %v891 = vpop.f32.mrb[0].mxu0
        %v892 = vadd.f32 0.0, %v891
        %v893 = vpop.f32.mrb[0].mxu0
        %v894 = vadd.f32 0.0, %v893
        %895 = vmatprep.mubr.f32.mxu0 0.0
        %896 = vmatmul.mubr.f32.gmra.mrb[0].mxu0 %v327
        %v897 = vpop.f32.mrb[0].mxu0
        %v898 = vadd.f32 0.0, %v897
        %v899 = vpop.f32.mrb[0].mxu0
        %v900 = vadd.f32 0.0, %v899
        %901 = vmatprep.mubr.f32.mxu0 0.0
        %902 = vmatmul.mubr.f32.gmra.mrb[0].mxu0 %v330
        %v903 = vpop.f32.mrb[0].mxu0
        %v904 = vadd.f32 0.0, %v903
        %v905 = vpop.f32.mrb[0].mxu0
        %v906 = vadd.f32 0.0, %v905
        %907 = vmatprep.mubr.f32.mxu0 0.0
        %908 = vmatmul.mubr.f32.gmra.mrb[0].mxu0 %v333
        %v909 = vpop.f32.mrb[0].mxu0
        %v910 = vadd.f32 0.0, %v909
        %v911 = vpop.f32.mrb[0].mxu0
        %v912 = vadd.f32 0.0, %v911
        %913 = vmatprep.mubr.f32.mxu0 0.0
        %914 = vmatmul.mubr.f32.gmra.mrb[0].mxu0 %v336
        %v915 = vpop.f32.mrb[0].mxu0
        %v916 = vadd.f32 0.0, %v915
        %v917 = vpop.f32.mrb[0].mxu0
        %v918 = vadd.f32 0.0, %v917
        %919 = vmatprep.mubr.f32.mxu0 0.0
        %920 = vmatmul.mubr.f32.gmra.mrb[0].mxu0 %v339
        %v921 = vpop.f32.mrb[0].mxu0
        %v922 = vadd.f32 0.0, %v921
        %v923 = vpop.f32.mrb[0].mxu0
        %v924 = vadd.f32 0.0, %v923
        %925 = vmatprep.mubr.f32.mxu0 0.0
        %926 = vmatmul.mubr.f32.gmra.mrb[0].mxu0 %v342
        %v927 = vpop.f32.mrb[0].mxu0
        %v928 = vadd.f32 0.0, %v927
        %v929 = vpop.f32.mrb[0].mxu0
        %v930 = vadd.f32 0.0, %v929
        %931 = vmatprep.mubr.f32.mxu0 0.0
        %932 = vmatmul.mubr.f32.gmra.mrb[0].mxu0 %v345
        %v933 = vpop.f32.mrb[0].mxu0
        %v934 = vadd.f32 0.0, %v933
        %v935 = vpop.f32.mrb[0].mxu0
        %v936 = vadd.f32 0.0, %v935
        %937 = vmatprep.mubr.f32.mxu0 0.0
        %938 = vmatmul.mubr.f32.gmra.mrb[0].mxu0 %v348
        %v939 = vpop.f32.mrb[0].mxu0
        %v940 = vadd.f32 0.0, %v939
        %v941 = vpop.f32.mrb[0].mxu0
        %v942 = vadd.f32 0.0, %v941
        %943 = vmatprep.mubr.f32.mxu0 0.0
        %944 = vmatmul.mubr.f32.gmra.mrb[0].mxu0 %v351
        %v945 = vpop.f32.mrb[0].mxu0
        %v946 = vadd.f32 0.0, %v945
        %v947 = vpop.f32.mrb[0].mxu0
        %v948 = vadd.f32 0.0, %v947
        %949 = vmatprep.mubr.f32.mxu0 0.0
        %950 = vmatmul.mubr.f32.gmra.mrb[0].mxu0 %v354
        %v951 = vpop.f32.mrb[0].mxu0
        %v952 = vadd.f32 0.0, %v951
        %v953 = vpop.f32.mrb[0].mxu0
        %v954 = vadd.f32 0.0, %v953
        %955 = vdwg.mxu0
        %v956 = vsel %vm519, %v862, 0.0
        %v957 = vsel %vm520, %v864, 0.0
        %v958 = vsel %vm519, %v868, 0.0
        %v959 = vsel %vm520, %v870, 0.0
        %v960 = vsel %vm519, %v874, 0.0
        %v961 = vsel %vm520, %v876, 0.0
        %v962 = vsel %vm519, %v880, 0.0
        %v963 = vsel %vm520, %v882, 0.0
        %v964 = vsel %vm519, %v886, 0.0
        %v965 = vsel %vm520, %v888, 0.0
        %v966 = vsel %vm519, %v892, 0.0
        %v967 = vsel %vm520, %v894, 0.0
        %v968 = vsel %vm519, %v898, 0.0
        %v969 = vsel %vm520, %v900, 0.0
        %v970 = vsel %vm519, %v904, 0.0
        %v971 = vsel %vm520, %v906, 0.0
        %v972 = vsel %vm519, %v910, 0.0
        %v973 = vsel %vm520, %v912, 0.0
        %v974 = vsel %vm519, %v916, 0.0
        %v975 = vsel %vm520, %v918, 0.0
        %v976 = vsel %vm519, %v922, 0.0
        %v977 = vsel %vm520, %v924, 0.0
        %v978 = vsel %vm519, %v928, 0.0
        %v979 = vsel %vm520, %v930, 0.0
        %v980 = vsel %vm519, %v934, 0.0
        %v981 = vsel %vm520, %v936, 0.0
        %v982 = vsel %vm519, %v940, 0.0
        %v983 = vsel %vm520, %v942, 0.0
        %v984 = vsel %vm519, %v946, 0.0
        %v985 = vsel %vm520, %v948, 0.0
        %v986 = vsel %vm519, %v952, 0.0
        %v987 = vsel %vm520, %v954, 0.0
        %v988 = vsel %vm519, %v862, -inf
        %v989 = vsel %vm520, %v864, -inf
        %v990 = vsel %vm519, %v868, -inf
        %v991 = vsel %vm520, %v870, -inf
        %v992 = vsel %vm519, %v874, -inf
        %v993 = vsel %vm520, %v876, -inf
        %v994 = vsel %vm519, %v880, -inf
        %v995 = vsel %vm520, %v882, -inf
        %v996 = vsel %vm519, %v886, -inf
        %v997 = vsel %vm520, %v888, -inf
        %v998 = vsel %vm519, %v892, -inf
        %v999 = vsel %vm520, %v894, -inf
        %v1000 = vsel %vm519, %v898, -inf
        %v1001 = vsel %vm520, %v900, -inf
        %v1002 = vsel %vm519, %v904, -inf
        %v1003 = vsel %vm520, %v906, -inf
        %v1004 = vsel %vm519, %v910, -inf
        %v1005 = vsel %vm520, %v912, -inf
        %v1006 = vsel %vm519, %v916, -inf
        %v1007 = vsel %vm520, %v918, -inf
        %v1008 = vsel %vm519, %v922, -inf
        %v1009 = vsel %vm520, %v924, -inf
        %v1010 = vsel %vm519, %v928, -inf
        %v1011 = vsel %vm520, %v930, -inf
        %v1012 = vsel %vm519, %v934, -inf
        %v1013 = vsel %vm520, %v936, -inf
        %v1014 = vsel %vm519, %v940, -inf
        %v1015 = vsel %vm520, %v942, -inf
        %v1016 = vsel %vm519, %v946, -inf
        %v1017 = vsel %vm520, %v948, -inf
        %v1018 = vsel %vm519, %v952, -inf
        %v1019 = vsel %vm520, %v954, -inf
        %s1020 = scalar_lea.vmem [#allocation2], 128
        %v1021 = vld [vmem:[%s1020] sm:$0xff]
        %v1022 = vld [vmem:[%s1020 + $0x8] sm:$0xff]
        %v1023 = vld [vmem:[%s1020 + $0x10] sm:$0xff]
        %v1024 = vld [vmem:[%s1020 + $0x18] sm:$0xff]
        %v1025 = vld [vmem:[%s1020 + $0x20] sm:$0xff]
        %v1026 = vld [vmem:[%s1020 + $0x28] sm:$0xff]
        %v1027 = vld [vmem:[%s1020 + $0x30] sm:$0xff]
        %v1028 = vld [vmem:[%s1020 + $0x38] sm:$0xff]
        %v1029 = vld [vmem:[%s1020 + $0x40] sm:$0xff]
        %v1030 = vld [vmem:[%s1020 + $0x48] sm:$0xff]
        %v1031 = vld [vmem:[%s1020 + $0x50] sm:$0xff]
        %v1032 = vld [vmem:[%s1020 + $0x58] sm:$0xff]
        %v1033 = vld [vmem:[%s1020 + $0x60] sm:$0xff]
        %v1034 = vld [vmem:[%s1020 + $0x68] sm:$0xff]
        %v1035 = vld [vmem:[%s1020 + $0x70] sm:$0xff]
        %v1036 = vld [vmem:[%s1020 + $0x78] sm:$0xff]
        %v1037 = vadd.f32 %v956, %v957
        %1038 = vadd.xlane.f32.xlu0 %v1037
        %v1039 = vpop.xlane.xlu0 %1038
        %v1040 = vadd.f32 %v958, %v959
        %1041 = vadd.xlane.f32.xlu0 %v1040
        %v1042 = vpop.xlane.xlu0 %1041
        %v1043 = vadd.f32 %v960, %v961
        %1044 = vadd.xlane.f32.xlu0 %v1043
        %v1045 = vpop.xlane.xlu0 %1044
        %v1046 = vadd.f32 %v962, %v963
        %1047 = vadd.xlane.f32.xlu0 %v1046
        %v1048 = vpop.xlane.xlu0 %1047
        %v1049 = vadd.f32 %v964, %v965
        %1050 = vadd.xlane.f32.xlu0 %v1049
        %v1051 = vpop.xlane.xlu0 %1050
        %v1052 = vadd.f32 %v966, %v967
        %1053 = vadd.xlane.f32.xlu0 %v1052
        %v1054 = vpop.xlane.xlu0 %1053
        %v1055 = vadd.f32 %v968, %v969
        %1056 = vadd.xlane.f32.xlu0 %v1055
        %v1057 = vpop.xlane.xlu0 %1056
        %v1058 = vadd.f32 %v970, %v971
        %1059 = vadd.xlane.f32.xlu0 %v1058
        %v1060 = vpop.xlane.xlu0 %1059
        %v1061 = vadd.f32 %v972, %v973
        %1062 = vadd.xlane.f32.xlu0 %v1061
        %v1063 = vpop.xlane.xlu0 %1062
        %v1064 = vadd.f32 %v974, %v975
        %1065 = vadd.xlane.f32.xlu0 %v1064
        %v1066 = vpop.xlane.xlu0 %1065
        %v1067 = vadd.f32 %v976, %v977
        %1068 = vadd.xlane.f32.xlu0 %v1067
        %v1069 = vpop.xlane.xlu0 %1068
        %v1070 = vadd.f32 %v978, %v979
        %1071 = vadd.xlane.f32.xlu0 %v1070
        %v1072 = vpop.xlane.xlu0 %1071
        %v1073 = vadd.f32 %v980, %v981
        %1074 = vadd.xlane.f32.xlu0 %v1073
        %v1075 = vpop.xlane.xlu0 %1074
        %v1076 = vadd.f32 %v982, %v983
        %1077 = vadd.xlane.f32.xlu0 %v1076
        %v1078 = vpop.xlane.xlu0 %1077
        %v1079 = vadd.f32 %v984, %v985
        %1080 = vadd.xlane.f32.xlu0 %v1079
        %v1081 = vpop.xlane.xlu0 %1080
        %v1082 = vadd.f32 %v986, %v987
        %1083 = vadd.xlane.f32.xlu0 %v1082
        %v1084 = vpop.xlane.xlu0 %1083
        %v1085 = vadd.f32 %v1021, %v1039
        %v1086 = vadd.f32 %v1022, %v1042
        %v1087 = vadd.f32 %v1023, %v1045
        %v1088 = vadd.f32 %v1024, %v1048
        %v1089 = vadd.f32 %v1025, %v1051
        %v1090 = vadd.f32 %v1026, %v1054
        %v1091 = vadd.f32 %v1027, %v1057
        %v1092 = vadd.f32 %v1028, %v1060
        %v1093 = vadd.f32 %v1029, %v1063
        %v1094 = vadd.f32 %v1030, %v1066
        %v1095 = vadd.f32 %v1031, %v1069
        %v1096 = vadd.f32 %v1032, %v1072
        %v1097 = vadd.f32 %v1033, %v1075
        %v1098 = vadd.f32 %v1034, %v1078
        %v1099 = vadd.f32 %v1035, %v1081
        %v1100 = vadd.f32 %v1036, %v1084
        %1101 = vst.msk [vmem:[%s1020] sm:$0xff] %vm665, %v1085
        %1102 = vst.msk [vmem:[%s1020 + $0x8] sm:$0xff] %vm665, %v1086
        %1103 = vst.msk [vmem:[%s1020 + $0x10] sm:$0xff] %vm665, %v1087
        %1104 = vst.msk [vmem:[%s1020 + $0x18] sm:$0xff] %vm665, %v1088
        %1105 = vst.msk [vmem:[%s1020 + $0x20] sm:$0xff] %vm665, %v1089
        %1106 = vst.msk [vmem:[%s1020 + $0x28] sm:$0xff] %vm665, %v1090
        %1107 = vst.msk [vmem:[%s1020 + $0x30] sm:$0xff] %vm665, %v1091
        %1108 = vst.msk [vmem:[%s1020 + $0x38] sm:$0xff] %vm665, %v1092
        %1109 = vst.msk [vmem:[%s1020 + $0x40] sm:$0xff] %vm665, %v1093
        %1110 = vst.msk [vmem:[%s1020 + $0x48] sm:$0xff] %vm665, %v1094
        %1111 = vst.msk [vmem:[%s1020 + $0x50] sm:$0xff] %vm665, %v1095
        %1112 = vst.msk [vmem:[%s1020 + $0x58] sm:$0xff] %vm665, %v1096
        %1113 = vst.msk [vmem:[%s1020 + $0x60] sm:$0xff] %vm665, %v1097
        %1114 = vst.msk [vmem:[%s1020 + $0x68] sm:$0xff] %vm665, %v1098
        %1115 = vst.msk [vmem:[%s1020 + $0x70] sm:$0xff] %vm665, %v1099
        %1116 = vst.msk [vmem:[%s1020 + $0x78] sm:$0xff] %vm665, %v1100
        %s1117 = scalar_lea.vmem [#allocation3], 128
        %v1118 = vld [vmem:[%s1117] sm:$0xff]
        %v1119 = vld [vmem:[%s1117 + $0x8] sm:$0xff]
        %v1120 = vld [vmem:[%s1117 + $0x10] sm:$0xff]
        %v1121 = vld [vmem:[%s1117 + $0x18] sm:$0xff]
        %v1122 = vld [vmem:[%s1117 + $0x20] sm:$0xff]
        %v1123 = vld [vmem:[%s1117 + $0x28] sm:$0xff]
        %v1124 = vld [vmem:[%s1117 + $0x30] sm:$0xff]
        %v1125 = vld [vmem:[%s1117 + $0x38] sm:$0xff]
        %v1126 = vld [vmem:[%s1117 + $0x40] sm:$0xff]
        %v1127 = vld [vmem:[%s1117 + $0x48] sm:$0xff]
        %v1128 = vld [vmem:[%s1117 + $0x50] sm:$0xff]
        %v1129 = vld [vmem:[%s1117 + $0x58] sm:$0xff]
        %v1130 = vld [vmem:[%s1117 + $0x60] sm:$0xff]
        %v1131 = vld [vmem:[%s1117 + $0x68] sm:$0xff]
        %v1132 = vld [vmem:[%s1117 + $0x70] sm:$0xff]
        %v1133 = vld [vmem:[%s1117 + $0x78] sm:$0xff]
        %v1134 = vmax.f32 %v988, %v989
        %1135 = vmax.xlane.f32.xlu0 %v1134
        %v1136 = vpop.xlane.xlu0 %1135
        %v1137 = vmax.f32 %v990, %v991
        %1138 = vmax.xlane.f32.xlu0 %v1137
        %v1139 = vpop.xlane.xlu0 %1138
        %v1140 = vmax.f32 %v992, %v993
        %1141 = vmax.xlane.f32.xlu0 %v1140
        %v1142 = vpop.xlane.xlu0 %1141
        %v1143 = vmax.f32 %v994, %v995
        %1144 = vmax.xlane.f32.xlu0 %v1143
        %v1145 = vpop.xlane.xlu0 %1144
        %v1146 = vmax.f32 %v996, %v997
        %1147 = vmax.xlane.f32.xlu0 %v1146
        %v1148 = vpop.xlane.xlu0 %1147
        %v1149 = vmax.f32 %v998, %v999
        %1150 = vmax.xlane.f32.xlu0 %v1149
        %v1151 = vpop.xlane.xlu0 %1150
        %v1152 = vmax.f32 %v1000, %v1001
        %1153 = vmax.xlane.f32.xlu0 %v1152
        %v1154 = vpop.xlane.xlu0 %1153
        %v1155 = vmax.f32 %v1002, %v1003
        %1156 = vmax.xlane.f32.xlu0 %v1155
        %v1157 = vpop.xlane.xlu0 %1156
        %v1158 = vmax.f32 %v1004, %v1005
        %1159 = vmax.xlane.f32.xlu0 %v1158
        %v1160 = vpop.xlane.xlu0 %1159
        %v1161 = vmax.f32 %v1006, %v1007
        %1162 = vmax.xlane.f32.xlu0 %v1161
        %v1163 = vpop.xlane.xlu0 %1162
        %v1164 = vmax.f32 %v1008, %v1009
        %1165 = vmax.xlane.f32.xlu0 %v1164
        %v1166 = vpop.xlane.xlu0 %1165
        %v1167 = vmax.f32 %v1010, %v1011
        %1168 = vmax.xlane.f32.xlu0 %v1167
        %v1169 = vpop.xlane.xlu0 %1168
        %v1170 = vmax.f32 %v1012, %v1013
        %1171 = vmax.xlane.f32.xlu0 %v1170
        %v1172 = vpop.xlane.xlu0 %1171
        %v1173 = vmax.f32 %v1014, %v1015
        %1174 = vmax.xlane.f32.xlu0 %v1173
        %v1175 = vpop.xlane.xlu0 %1174
        %v1176 = vmax.f32 %v1016, %v1017
        %1177 = vmax.xlane.f32.xlu0 %v1176
        %v1178 = vpop.xlane.xlu0 %1177
        %v1179 = vmax.f32 %v1018, %v1019
        %1180 = vmax.xlane.f32.xlu0 %v1179
        %v1181 = vpop.xlane.xlu0 %1180
        %v1182 = vmax.f32 %v1118, %v1136
        %v1183 = vmax.f32 %v1119, %v1139
        %v1184 = vmax.f32 %v1120, %v1142
        %v1185 = vmax.f32 %v1121, %v1145
        %v1186 = vmax.f32 %v1122, %v1148
        %v1187 = vmax.f32 %v1123, %v1151
        %v1188 = vmax.f32 %v1124, %v1154
        %v1189 = vmax.f32 %v1125, %v1157
        %v1190 = vmax.f32 %v1126, %v1160
        %v1191 = vmax.f32 %v1127, %v1163
        %v1192 = vmax.f32 %v1128, %v1166
        %v1193 = vmax.f32 %v1129, %v1169
        %v1194 = vmax.f32 %v1130, %v1172
        %v1195 = vmax.f32 %v1131, %v1175
        %v1196 = vmax.f32 %v1132, %v1178
        %v1197 = vmax.f32 %v1133, %v1181
        %1198 = vst.msk [vmem:[%s1117] sm:$0xff] %vm665, %v1182
        %1199 = vst.msk [vmem:[%s1117 + $0x8] sm:$0xff] %vm665, %v1183
        %1200 = vst.msk [vmem:[%s1117 + $0x10] sm:$0xff] %vm665, %v1184
        %1201 = vst.msk [vmem:[%s1117 + $0x18] sm:$0xff] %vm665, %v1185
        %1202 = vst.msk [vmem:[%s1117 + $0x20] sm:$0xff] %vm665, %v1186
        %1203 = vst.msk [vmem:[%s1117 + $0x28] sm:$0xff] %vm665, %v1187
        %1204 = vst.msk [vmem:[%s1117 + $0x30] sm:$0xff] %vm665, %v1188
        %1205 = vst.msk [vmem:[%s1117 + $0x38] sm:$0xff] %vm665, %v1189
        %1206 = vst.msk [vmem:[%s1117 + $0x40] sm:$0xff] %vm665, %v1190
        %1207 = vst.msk [vmem:[%s1117 + $0x48] sm:$0xff] %vm665, %v1191
        %1208 = vst.msk [vmem:[%s1117 + $0x50] sm:$0xff] %vm665, %v1192
        %1209 = vst.msk [vmem:[%s1117 + $0x58] sm:$0xff] %vm665, %v1193
        %1210 = vst.msk [vmem:[%s1117 + $0x60] sm:$0xff] %vm665, %v1194
        %1211 = vst.msk [vmem:[%s1117 + $0x68] sm:$0xff] %vm665, %v1195
        %1212 = vst.msk [vmem:[%s1117 + $0x70] sm:$0xff] %vm665, %v1196
        %1213 = vst.msk [vmem:[%s1117 + $0x78] sm:$0xff] %vm665, %v1197
        %p1214 = scmp.eq.s32.totalorder %s21, 2
        // Predicated region
        $region37: #{tpu_custom_call.1} parent=27 // pred_check
          %p1215 = pneg %p1214
        $region38: #{tpu_custom_call.1} parent=27 // pred_check_branch
          %1217 = sbr.rel (%p1215) target = $region40
        $region39: #{tpu_custom_call.1} parent=27 // pred_region
          %v1218 = vld [vmem:[#allocation2] sm:$0xff]
          %v1219 = vld [vmem:[#allocation2 + $0x8] sm:$0xff]
          %v1220 = vld [vmem:[#allocation2 + $0x10] sm:$0xff]
          %v1221 = vld [vmem:[#allocation2 + $0x18] sm:$0xff]
          %v1222 = vld [vmem:[#allocation2 + $0x20] sm:$0xff]
          %v1223 = vld [vmem:[#allocation2 + $0x28] sm:$0xff]
          %v1224 = vld [vmem:[#allocation2 + $0x30] sm:$0xff]
          %v1225 = vld [vmem:[#allocation2 + $0x38] sm:$0xff]
          %v1226 = vld [vmem:[#allocation2 + $0x40] sm:$0xff]
          %v1227 = vld [vmem:[#allocation2 + $0x48] sm:$0xff]
          %v1228 = vld [vmem:[#allocation2 + $0x50] sm:$0xff]
          %v1229 = vld [vmem:[#allocation2 + $0x58] sm:$0xff]
          %v1230 = vld [vmem:[#allocation2 + $0x60] sm:$0xff]
          %v1231 = vld [vmem:[#allocation2 + $0x68] sm:$0xff]
          %v1232 = vld [vmem:[#allocation2 + $0x70] sm:$0xff]
          %v1233 = vld [vmem:[#allocation2 + $0x78] sm:$0xff]
          %v1234 = vld [vmem:[#allocation2 + $0x80] sm:$0xff]
          %v1235 = vld [vmem:[#allocation2 + $0x88] sm:$0xff]
          %v1236 = vld [vmem:[#allocation2 + $0x90] sm:$0xff]
          %v1237 = vld [vmem:[#allocation2 + $0x98] sm:$0xff]
          %v1238 = vld [vmem:[#allocation2 + $0xa0] sm:$0xff]
          %v1239 = vld [vmem:[#allocation2 + $0xa8] sm:$0xff]
          %v1240 = vld [vmem:[#allocation2 + $0xb0] sm:$0xff]
          %v1241 = vld [vmem:[#allocation2 + $0xb8] sm:$0xff]
          %v1242 = vld [vmem:[#allocation2 + $0xc0] sm:$0xff]
          %v1243 = vld [vmem:[#allocation2 + $0xc8] sm:$0xff]
          %v1244 = vld [vmem:[#allocation2 + $0xd0] sm:$0xff]
          %v1245 = vld [vmem:[#allocation2 + $0xd8] sm:$0xff]
          %v1246 = vld [vmem:[#allocation2 + $0xe0] sm:$0xff]
          %v1247 = vld [vmem:[#allocation2 + $0xe8] sm:$0xff]
          %v1248 = vld [vmem:[#allocation2 + $0xf0] sm:$0xff]
          %v1249 = vld [vmem:[#allocation2 + $0xf8] sm:$0xff]
          %v1250 = vmul.f32 %v1218, 0.0017361111
          %v1251 = vmul.f32 %v1219, 0.0017361111
          %v1252 = vmul.f32 %v1220, 0.0017361111
          %v1253 = vmul.f32 %v1221, 0.0017361111
          %v1254 = vmul.f32 %v1222, 0.0017361111
          %v1255 = vmul.f32 %v1223, 0.0017361111
          %v1256 = vmul.f32 %v1224, 0.0017361111
          %v1257 = vmul.f32 %v1225, 0.0017361111
          %v1258 = vmul.f32 %v1226, 0.0017361111
          %v1259 = vmul.f32 %v1227, 0.0017361111
          %v1260 = vmul.f32 %v1228, 0.0017361111
          %v1261 = vmul.f32 %v1229, 0.0017361111
          %v1262 = vmul.f32 %v1230, 0.0017361111
          %v1263 = vmul.f32 %v1231, 0.0017361111
          %v1264 = vmul.f32 %v1232, 0.0017361111
          %v1265 = vmul.f32 %v1233, 0.0017361111
          %v1266 = vmul.f32 %v1234, 0.0017361111
          %v1267 = vmul.f32 %v1235, 0.0017361111
          %v1268 = vmul.f32 %v1236, 0.0017361111
          %v1269 = vmul.f32 %v1237, 0.0017361111
          %v1270 = vmul.f32 %v1238, 0.0017361111
          %v1271 = vmul.f32 %v1239, 0.0017361111
          %v1272 = vmul.f32 %v1240, 0.0017361111
          %v1273 = vmul.f32 %v1241, 0.0017361111
          %v1274 = vmul.f32 %v1242, 0.0017361111
          %v1275 = vmul.f32 %v1243, 0.0017361111
          %v1276 = vmul.f32 %v1244, 0.0017361111
          %v1277 = vmul.f32 %v1245, 0.0017361111
          %v1278 = vmul.f32 %v1246, 0.0017361111
          %v1279 = vmul.f32 %v1247, 0.0017361111
          %v1280 = vmul.f32 %v1248, 0.0017361111
          %v1281 = vmul.f32 %v1249, 0.0017361111
          %v1282 = vld [vmem:[#allocation3] sm:$0xff]
          %v1283 = vld [vmem:[#allocation3 + $0x8] sm:$0xff]
          %v1284 = vld [vmem:[#allocation3 + $0x10] sm:$0xff]
          %v1285 = vld [vmem:[#allocation3 + $0x18] sm:$0xff]
          %v1286 = vld [vmem:[#allocation3 + $0x20] sm:$0xff]
          %v1287 = vld [vmem:[#allocation3 + $0x28] sm:$0xff]
          %v1288 = vld [vmem:[#allocation3 + $0x30] sm:$0xff]
          %v1289 = vld [vmem:[#allocation3 + $0x38] sm:$0xff]
          %v1290 = vld [vmem:[#allocation3 + $0x40] sm:$0xff]
          %v1291 = vld [vmem:[#allocation3 + $0x48] sm:$0xff]
          %v1292 = vld [vmem:[#allocation3 + $0x50] sm:$0xff]
          %v1293 = vld [vmem:[#allocation3 + $0x58] sm:$0xff]
          %v1294 = vld [vmem:[#allocation3 + $0x60] sm:$0xff]
          %v1295 = vld [vmem:[#allocation3 + $0x68] sm:$0xff]
          %v1296 = vld [vmem:[#allocation3 + $0x70] sm:$0xff]
          %v1297 = vld [vmem:[#allocation3 + $0x78] sm:$0xff]
          %v1298 = vld [vmem:[#allocation3 + $0x80] sm:$0xff]
          %v1299 = vld [vmem:[#allocation3 + $0x88] sm:$0xff]
          %v1300 = vld [vmem:[#allocation3 + $0x90] sm:$0xff]
          %v1301 = vld [vmem:[#allocation3 + $0x98] sm:$0xff]
          %v1302 = vld [vmem:[#allocation3 + $0xa0] sm:$0xff]
          %v1303 = vld [vmem:[#allocation3 + $0xa8] sm:$0xff]
          %v1304 = vld [vmem:[#allocation3 + $0xb0] sm:$0xff]
          %v1305 = vld [vmem:[#allocation3 + $0xb8] sm:$0xff]
          %v1306 = vld [vmem:[#allocation3 + $0xc0] sm:$0xff]
          %v1307 = vld [vmem:[#allocation3 + $0xc8] sm:$0xff]
          %v1308 = vld [vmem:[#allocation3 + $0xd0] sm:$0xff]
          %v1309 = vld [vmem:[#allocation3 + $0xd8] sm:$0xff]
          %v1310 = vld [vmem:[#allocation3 + $0xe0] sm:$0xff]
          %v1311 = vld [vmem:[#allocation3 + $0xe8] sm:$0xff]
          %v1312 = vld [vmem:[#allocation3 + $0xf0] sm:$0xff]
          %v1313 = vld [vmem:[#allocation3 + $0xf8] sm:$0xff]
          %v1314 = vmul.f32 %v1282, 0.2
          %v1315 = vmul.f32 %v1283, 0.2
          %v1316 = vmul.f32 %v1284, 0.2
          %v1317 = vmul.f32 %v1285, 0.2
          %v1318 = vmul.f32 %v1286, 0.2
          %v1319 = vmul.f32 %v1287, 0.2
          %v1320 = vmul.f32 %v1288, 0.2
          %v1321 = vmul.f32 %v1289, 0.2
          %v1322 = vmul.f32 %v1290, 0.2
          %v1323 = vmul.f32 %v1291, 0.2
          %v1324 = vmul.f32 %v1292, 0.2
          %v1325 = vmul.f32 %v1293, 0.2
          %v1326 = vmul.f32 %v1294, 0.2
          %v1327 = vmul.f32 %v1295, 0.2
          %v1328 = vmul.f32 %v1296, 0.2
          %v1329 = vmul.f32 %v1297, 0.2
          %v1330 = vmul.f32 %v1298, 0.2
          %v1331 = vmul.f32 %v1299, 0.2
          %v1332 = vmul.f32 %v1300, 0.2
          %v1333 = vmul.f32 %v1301, 0.2
          %v1334 = vmul.f32 %v1302, 0.2
          %v1335 = vmul.f32 %v1303, 0.2
          %v1336 = vmul.f32 %v1304, 0.2
          %v1337 = vmul.f32 %v1305, 0.2
          %v1338 = vmul.f32 %v1306, 0.2
          %v1339 = vmul.f32 %v1307, 0.2
          %v1340 = vmul.f32 %v1308, 0.2
          %v1341 = vmul.f32 %v1309, 0.2
          %v1342 = vmul.f32 %v1310, 0.2
          %v1343 = vmul.f32 %v1311, 0.2
          %v1344 = vmul.f32 %v1312, 0.2
          %v1345 = vmul.f32 %v1313, 0.2
          %v1346 = vadd.f32 %v1250, %v1314
          %v1347 = vadd.f32 %v1251, %v1315
          %v1348 = vadd.f32 %v1252, %v1316
          %v1349 = vadd.f32 %v1253, %v1317
          %v1350 = vadd.f32 %v1254, %v1318
          %v1351 = vadd.f32 %v1255, %v1319
          %v1352 = vadd.f32 %v1256, %v1320
          %v1353 = vadd.f32 %v1257, %v1321
          %v1354 = vadd.f32 %v1258, %v1322
          %v1355 = vadd.f32 %v1259, %v1323
          %v1356 = vadd.f32 %v1260, %v1324
          %v1357 = vadd.f32 %v1261, %v1325
          %v1358 = vadd.f32 %v1262, %v1326
          %v1359 = vadd.f32 %v1263, %v1327
          %v1360 = vadd.f32 %v1264, %v1328
          %v1361 = vadd.f32 %v1265, %v1329
          %v1362 = vadd.f32 %v1266, %v1330
          %v1363 = vadd.f32 %v1267, %v1331
          %v1364 = vadd.f32 %v1268, %v1332
          %v1365 = vadd.f32 %v1269, %v1333
          %v1366 = vadd.f32 %v1270, %v1334
          %v1367 = vadd.f32 %v1271, %v1335
          %v1368 = vadd.f32 %v1272, %v1336
          %v1369 = vadd.f32 %v1273, %v1337
          %v1370 = vadd.f32 %v1274, %v1338
          %v1371 = vadd.f32 %v1275, %v1339
          %v1372 = vadd.f32 %v1276, %v1340
          %v1373 = vadd.f32 %v1277, %v1341
          %v1374 = vadd.f32 %v1278, %v1342
          %v1375 = vadd.f32 %v1279, %v1343
          %v1376 = vadd.f32 %v1280, %v1344
          %v1377 = vadd.f32 %v1281, %v1345
          %1378 = vst.msk [vmem:[%s195] sm:$0xff] %vm665, %v1346
          %1379 = vst.msk [vmem:[%s195 + $0x8] sm:$0xff] %vm665, %v1347
          %1380 = vst.msk [vmem:[%s195 + $0x10] sm:$0xff] %vm665, %v1348
          %1381 = vst.msk [vmem:[%s195 + $0x18] sm:$0xff] %vm665, %v1349
          %1382 = vst.msk [vmem:[%s195 + $0x20] sm:$0xff] %vm665, %v1350
          %1383 = vst.msk [vmem:[%s195 + $0x28] sm:$0xff] %vm665, %v1351
          %1384 = vst.msk [vmem:[%s195 + $0x30] sm:$0xff] %vm665, %v1352
          %1385 = vst.msk [vmem:[%s195 + $0x38] sm:$0xff] %vm665, %v1353
          %1386 = vst.msk [vmem:[%s195 + $0x40] sm:$0xff] %vm665, %v1354
          %1387 = vst.msk [vmem:[%s195 + $0x48] sm:$0xff] %vm665, %v1355
          %1388 = vst.msk [vmem:[%s195 + $0x50] sm:$0xff] %vm665, %v1356
          %1389 = vst.msk [vmem:[%s195 + $0x58] sm:$0xff] %vm665, %v1357
          %1390 = vst.msk [vmem:[%s195 + $0x60] sm:$0xff] %vm665, %v1358
          %1391 = vst.msk [vmem:[%s195 + $0x68] sm:$0xff] %vm665, %v1359
          %1392 = vst.msk [vmem:[%s195 + $0x70] sm:$0xff] %vm665, %v1360
          %1393 = vst.msk [vmem:[%s195 + $0x78] sm:$0xff] %vm665, %v1361
          %1394 = vst.msk [vmem:[%s195 + $0x80] sm:$0xff] %vm665, %v1362
          %1395 = vst.msk [vmem:[%s195 + $0x88] sm:$0xff] %vm665, %v1363
          %1396 = vst.msk [vmem:[%s195 + $0x90] sm:$0xff] %vm665, %v1364
          %1397 = vst.msk [vmem:[%s195 + $0x98] sm:$0xff] %vm665, %v1365
          %1398 = vst.msk [vmem:[%s195 + $0xa0] sm:$0xff] %vm665, %v1366
          %1399 = vst.msk [vmem:[%s195 + $0xa8] sm:$0xff] %vm665, %v1367
          %1400 = vst.msk [vmem:[%s195 + $0xb0] sm:$0xff] %vm665, %v1368
          %1401 = vst.msk [vmem:[%s195 + $0xb8] sm:$0xff] %vm665, %v1369
          %1402 = vst.msk [vmem:[%s195 + $0xc0] sm:$0xff] %vm665, %v1370
          %1403 = vst.msk [vmem:[%s195 + $0xc8] sm:$0xff] %vm665, %v1371
          %1404 = vst.msk [vmem:[%s195 + $0xd0] sm:$0xff] %vm665, %v1372
          %1405 = vst.msk [vmem:[%s195 + $0xd8] sm:$0xff] %vm665, %v1373
          %1406 = vst.msk [vmem:[%s195 + $0xe0] sm:$0xff] %vm665, %v1374
          %1407 = vst.msk [vmem:[%s195 + $0xe8] sm:$0xff] %vm665, %v1375
          %1408 = vst.msk [vmem:[%s195 + $0xf0] sm:$0xff] %vm665, %v1376
          %1409 = vst.msk [vmem:[%s195 + $0xf8] sm:$0xff] %vm665, %v1377
        $region40: #{tpu_custom_call.1} parent=27 // pred_fallthru
          _
        %s1410 = smul.u32 2, %s20
        %p1411 = scmp.lt.s32.totalorder %s1410, 1
        %s1412 = scalar_select %p1411, %s1410, 1
        %s1413 = smul.addr %s1412, 16
        %s1414 = smul.addr %s1413, 8
        %s1415 = scalar_lea.vmem %s2, %s1414
        // Predicated region
        $region41: #{tpu_custom_call.1} parent=27 // pred_check
          %p1416 = pneg %p95
        $region42: #{tpu_custom_call.1} parent=27 // pred_check_branch
          %1418 = sbr.rel (%p1416) target = $region44
        $region43: #{tpu_custom_call.1} parent=27 // pred_region
          %s1419 = smul.u32 2, %s20
        $region44: #{tpu_custom_call.1} parent=27 // pred_fallthru
          _
        // Predicated region
        $region45: #{tpu_custom_call.1} parent=27 // pred_check
          %p1420 = pneg %p95
        $region46: #{tpu_custom_call.1} parent=27 // pred_check_branch
          %1422 = sbr.rel (%p1420) target = $region48
        $region47: #{tpu_custom_call.1} parent=27 // pred_region
          %s1423 = smul.u32 2, %s20
          %p1424 = scmp.lt.s32.totalorder %s1423, 1
          %s1425 = scalar_select %p1424, %s1423, 1
          %s1426 = smul.addr %s1425, 16
          %s1427 = smul.addr %s1426, 8
          %s1428 = scalar_lea.vmem %s2, %s1427
        $region48: #{tpu_custom_call.1} parent=27 // pred_fallthru
          _
      $region28: #{tpu_custom_call.1} parent=5 // pred_fallthru
        _
      %p1429 = scmp.le.s32.totalorder 2, %s11
      // Predicated region
      $region49: #{tpu_custom_call.1} parent=5 // pred_check
        %p1430 = pneg %p1429
      $region50: #{tpu_custom_call.1} parent=5 // pred_check_branch
        %1432 = sbr.rel (%p1430) target = $region52
      $region51: #{tpu_custom_call.1} parent=5 // pred_region
        %s1433 = ssub.s32 %s11, 2
      $region52: #{tpu_custom_call.1} parent=5 // pred_fallthru
        _
    $region6: #{tpu_custom_call.1} parent=1 // loop_footer
      %s15 = sadd.s32 1, %s11
    $region7: #{tpu_custom_call.1} parent=1 // loop_footer_branch
      %10 = sbr.rel target = $region3
    $region8: #{tpu_custom_call.1} parent=1 // loop_exit
      _
    %1434 = vsyncpa [#allocation5], 1
    %s1435 = scalar_lea.sflag [#allocation5], 1
    %1436 = vsyncpa %s1435, 1

</llo_original>
